<compile_context>
chip_gen: v6e
topology: v6e:2x2x1
jax: 0.10.0
libtpu: 0.0.40
codegen_flags: <defaults>
</compile_context>

<pallas_src>
import math

import numpy as np

import jax
import jax.numpy as jnp
from jax.experimental import pallas as pl
from jax.experimental.pallas import tpu as pltpu

CFG = [8, "M", 16, "M"]   # conv3x3(pad=1)+ReLU for ints, 2x2/stride-2 maxpool for 'M'
IN_CHANNELS = 3

# MXU input dtype for the conv matmuls.  Set to jnp.bfloat16 on v6e/v7x for native
# bf16 MXU passes and a halved im2col-slab footprint; kept float32 here so the
# script's 2e-3 correctness check stays comfortably satisfied.
MXU_DTYPE = jnp.float32

# Max images packed per grid step.  Layer-1 im2col slab is ~74 KiB f32 per image,
# so Bt=32 keeps the live slab ~2.4 MiB (fits the v7x 32 MiB scoped VMEM easily)
# while keeping the unrolled per-image pool loop modest.  (Review suggests up to
# 128-256 is feasible on VMEM grounds.)
BT_MAX = 32


def _ceil_to(x, m):
    return ((x + m - 1) // m) * m


# ---------------------------------------------------------------------------
# In-kernel helpers (activations laid out as (C, Bt*H*W): C on sublanes,
# Bt images packed along the lane axis)
# ---------------------------------------------------------------------------
def _shift_cols(a, s):
    """b[:, j] = a[:, j + s]; positions shifted in from outside are zero."""
    if s == 0:
        return a
    c, n = a.shape
    if s > 0:
        return jnp.concatenate([a[:, s:], jnp.zeros((c, s), a.dtype)], axis=1)
    k = -s
    return jnp.concatenate([jnp.zeros((c, k), a.dtype), a[:, : n - k]], axis=1)


def _build_fused_kernel(plan, bt):
    """plan: tuple of ('conv', cin_p, cout, H, W) / ('pool', C, H, W) entries."""

    def kernel(*refs):
        x_ref, o_ref = refs[0], refs[-1]
        prefs = refs[1:-1]
        a = x_ref[...]                                 # (C0, Bt*H*W) float32
        ri = 0
        for item in plan:
            if item[0] == "conv":
                _, cin_p, cout, H, W = item
                w_ref, b_ref, m_ref = prefs[ri], prefs[ri + 1], prefs[ri + 2]
                ri += 3
                # im2col: 9 lane-shifted copies -> (9*cin_p, Bt*H*W).  Only the 8
                # non-centre taps need a mask; each mask is one (1, L) row
                # broadcast over the cin sublanes (no per-channel masks).
                slabs = []
                mi = 0
                for kh in range(3):
                    for kw in range(3):
                        s = (kh - 1) * W + (kw - 1)
                        shifted = _shift_cols(a, s)
                        if kh == 1 and kw == 1:
                            slabs.append(shifted)              # centre tap: no mask
                        else:
                            slabs.append(shifted * m_ref[mi:mi + 1, :])
                            mi += 1
                patches = jnp.concatenate(slabs, axis=0)
                lhs, rhs = w_ref[...], patches
                if MXU_DTYPE != jnp.float32:
                    lhs = lhs.astype(MXU_DTYPE)
                    rhs = rhs.astype(MXU_DTYPE)
                # single MXU matmul per conv, Bt*H*W lane-dense on the output
                acc = jnp.dot(lhs, rhs, preferred_element_type=jnp.float32)
                a = jnp.maximum(acc + b_ref[...], 0.0)          # bias + ReLU
            else:  # 2x2 / stride-2 maxpool
                _, _, H, W = item
                s_ref = prefs[ri]
                ri += 1
                hw = H * W
                m1 = jnp.maximum(a, _shift_cols(a, 1))          # right neighbour
                m2 = jnp.maximum(m1, _shift_cols(m1, W))        # row below
                # per-image even-(h, w) anchor selection: (C, H*W) @ (H*W, Ho*Wo)
                # in a static loop (linear in Bt, f32, never block-diagonal).
                pieces = []
                for i in range(bt):
                    seg = m2[:, i * hw:(i + 1) * hw]
                    pieces.append(jnp.dot(seg, s_ref[...],
                                          preferred_element_type=jnp.float32))
                a = pieces[0] if bt == 1 else jnp.concatenate(pieces, axis=1)
        # one wide, lane-dense store: (C_final, Bt*Ho*Wo)
        o_ref[...] = a.astype(o_ref.dtype)

    return kernel


# ---------------------------------------------------------------------------
# Host-side constant builders (numpy -> baked constants at trace time)
# ---------------------------------------------------------------------------
def _tap_masks_np(H, W, bt):
    """(8, bt*H*W) {0,1} masks for the 8 non-centre taps, tiled per image."""
    hs, ws = np.arange(H), np.arange(W)
    rows = []
    for kh in range(3):
        for kw in range(3):
            if kh == 1 and kw == 1:
                continue
            dh, dw = kh - 1, kw - 1
            mh = (hs + dh >= 0) & (hs + dh < H)
            mw = (ws + dw >= 0) & (ws + dw < W)
            m = (mh[:, None] & mw[None, :]).reshape(H * W)
            rows.append(np.tile(m, bt))
    return np.stack(rows, 0).astype(np.float32)


def _pool_select_np(H, W):
    """(H*W, Ho*Wo) 0/1 matrix selecting the even-(h, w) anchor columns."""
    Ho, Wo = H // 2, W // 2
    oc = np.arange(Ho * Wo)
    anchors = (oc // Wo) * (2 * W) + (oc % Wo) * 2
    rows = np.arange(H * W)
    return (rows[:, None] == anchors[None, :]).astype(np.float32)


def _conv_weight_matrix(w_oihw, cin_p):
    """OIHW -> (Cout, 9*cin_p) with columns ordered (kh, kw, c)."""
    cout, cin = w_oihw.shape[0], w_oihw.shape[1]
    if cin_p != cin:
        w_oihw = jnp.pad(w_oihw, ((0, 0), (0, cin_p - cin), (0, 0), (0, 0)))
    return jnp.transpose(w_oihw, (0, 2, 3, 1)).reshape(cout, 9 * cin_p)


def _choose_bt(N, hw0, f_final):
    """Images per grid step.  Small batches: one step (blocks == full arrays).
    Larger batches: >=2 grid steps (both TCs on v7x) with 128-aligned lane blocks."""
    if N <= 8:
        return N
    def lane_step(d):
        return 128 // math.gcd(128, d)
    step = math.lcm(lane_step(hw0), lane_step(f_final))
    target = max(step, min(BT_MAX, N // 2))
    return max(step, (target // step) * step)


# ---------------------------------------------------------------------------
# Parameters + forward
# ---------------------------------------------------------------------------
def init_params(key, cfg=CFG, in_channels=IN_CHANNELS):
    params = []
    c_in = in_channels
    for v in cfg:
        if v == "M":
            continue
        c_out = int(v)
        key, wk = jax.random.split(key)
        n = 3 * 3 * c_out
        # PyTorch init: weight ~ N(0, sqrt(2/n)) in OIHW, bias = 0
        w = jax.random.normal(wk, (c_out, c_in, 3, 3), jnp.float32) * math.sqrt(2.0 / n)
        b = jnp.zeros((c_out,), jnp.float32)
        params.append((w, b))
        c_in = c_out
    return params


@jax.jit
def vgg_conv_blocks_forward(x_nchw, params):
    # x_nchw: (N, C, H, W) -- same as the PyTorch module input
    N, c_in, H0, W0 = x_nchw.shape
    C0 = _ceil_to(c_in, 8)

    # Final feature-map geometry (for Bt choice / output spec).
    H, W, C = H0, W0, C0
    for v in CFG:
        if v == "M":
            assert H % 2 == 0 and W % 2 == 0, "2x2/stride-2 maxpool needs even H, W"
            H, W = H // 2, W // 2
        else:
            C = int(v)
    f_final, c_final = H * W, C

    bt = _choose_bt(N, H0 * W0, f_final)
    n_pad = _ceil_to(N, bt)
    grid = n_pad // bt

    # Lane-pack the batch: (N, Cin, H, W) -> (Cin_pad, N_pad*H*W).  This single
    # repack (transpose fused with the channel / batch zero-pad) is what enables
    # the (C, Bt*H*W) in-kernel layout; it replaces the old standalone channel pad.
    x2 = x_nchw.reshape(N, c_in, H0 * W0)
    x2 = jnp.transpose(x2, (1, 0, 2)).reshape(c_in, N * H0 * W0)
    x2 = jnp.pad(x2, ((0, C0 - c_in), (0, (n_pad - N) * H0 * W0)))

    inputs = [x2]
    in_specs = [pl.BlockSpec((C0, bt * H0 * W0), lambda n: (0, n))]
    plan = []
    H, W, C = H0, W0, C0
    pi = 0
    for v in CFG:
        if v == "M":
            S = jnp.asarray(_pool_select_np(H, W))
            inputs.append(S)
            in_specs.append(pl.BlockSpec(S.shape, lambda n: (0, 0)))
            plan.append(("pool", C, H, W))
            H, W = H // 2, W // 2
        else:
            cout = int(v)
            w_oihw, b = params[pi]
            pi += 1
            wmat = _conv_weight_matrix(w_oihw, C)
            masks = jnp.asarray(_tap_masks_np(H, W, bt))
            inputs.extend([wmat, b.reshape(cout, 1), masks])
            in_specs.extend([
                pl.BlockSpec(wmat.shape, lambda n: (0, 0)),
                pl.BlockSpec((cout, 1), lambda n: (0, 0)),
                pl.BlockSpec(masks.shape, lambda n: (0, 0)),
            ])
            plan.append(("conv", C, cout, H, W))
            C = cout

    out = pl.pallas_call(
        _build_fused_kernel(tuple(plan), bt),
        out_shape=jax.ShapeDtypeStruct((c_final, n_pad * f_final), jnp.float32),
        grid_spec=pltpu.PrefetchScalarGridSpec(
            num_scalar_prefetch=0,
            grid=(grid,),                       # Bt images per grid step
            in_specs=in_specs,
            out_specs=pl.BlockSpec((c_final, bt * f_final), lambda n: (0, n)),
        ),
        compiler_params=pltpu.CompilerParams(
            dimension_semantics=("parallel",)),  # both TCs on v7x when grid >= 2
    )(*inputs)

    # Kernel output is lane-packed (C_final, image, Ho*Wo); one tiny wrapper-side
    # transpose (layout plumbing for the lane-dense store) recovers torch's
    # x.view(N, -1) order (c, h, w) per image.
    out = out.reshape(c_final, n_pad, f_final)[:, :N, :]
    return jnp.transpose(out, (1, 0, 2)).reshape(N, c_final * f_final)


def reference_forward(x_nchw, params):
    # Pure-JAX reference (correctness check only).
    x = x_nchw
    pi = 0
    for v in CFG:
        if v == "M":
            x = jax.lax.reduce_window(x, -jnp.inf, jax.lax.max,
                                      (1, 1, 2, 2), (1, 1, 2, 2), "VALID")
        else:
            w, b = params[pi]
            pi += 1
            x = jax.lax.conv_general_dilated(
                x, w, (1, 1), "SAME",
                dimension_numbers=("NCHW", "OIHW", "NCHW"),
                precision=jax.lax.Precision.HIGHEST)
            x = jnp.maximum(x + b[None, :, None, None], 0.0)
    return x.reshape(x.shape[0], -1)


if __name__ == "__main__":
    key = jax.random.PRNGKey(0)
    key, xk = jax.random.split(key)
    # Small shapes consistent with the module: NCHW, 3 input channels.
    x = jax.random.normal(xk, (2, IN_CHANNELS, 16, 16), jnp.float32)
    params = init_params(key)

    out = jax.block_until_ready(vgg_conv_blocks_forward(x, params))

    # 16x16 -> (conv8, pool, conv16, pool) -> 16 ch x 4 x 4 = 256 features
    assert out.shape == (2, 16 * 4 * 4), out.shape

    ref = reference_forward(x, params)
    assert jnp.allclose(out, ref, atol=2e-3, rtol=2e-3), \
        float(jnp.max(jnp.abs(out - ref)))

    print("KERNEL_OK")
</pallas_src>

<mosaic_0001>
module attributes {stable_mosaic.version = 11 : i64} {
  func.func @kernel(%arg0: i32, %arg1: memref<8x512xf32, #tpu.memory_space<vmem>>, %arg2: memref<8x72xf32, #tpu.memory_space<vmem>>, %arg3: memref<8x1xf32, #tpu.memory_space<vmem>>, %arg4: memref<8x512xf32, #tpu.memory_space<vmem>>, %arg5: memref<256x64xf32, #tpu.memory_space<vmem>>, %arg6: memref<16x72xf32, #tpu.memory_space<vmem>>, %arg7: memref<16x1xf32, #tpu.memory_space<vmem>>, %arg8: memref<8x128xf32, #tpu.memory_space<vmem>>, %arg9: memref<64x16xf32, #tpu.memory_space<vmem>>, %arg10: memref<16x32xf32, #tpu.memory_space<vmem>>) attributes {dimension_semantics = [#tpu.dimension_semantics<parallel>], iteration_bounds = array<i64: 1>, scalar_prefetch = 0 : i64, scratch_operands = 0 : i64, tpu.core_type = #tpu.core_type<tc>, window_params = [{transform_indices = @transform_0, window_bounds = array<i64: 8, 512>}, {pipeline_mode = #tpu.pipeline_mode<synchronous>, transform_indices = @transform_1, window_bounds = array<i64: 8, 72>}, {pipeline_mode = #tpu.pipeline_mode<synchronous>, transform_indices = @transform_2, window_bounds = array<i64: 8, 1>}, {pipeline_mode = #tpu.pipeline_mode<synchronous>, transform_indices = @transform_3, window_bounds = array<i64: 8, 512>}, {pipeline_mode = #tpu.pipeline_mode<synchronous>, transform_indices = @transform_4, window_bounds = array<i64: 256, 64>}, {pipeline_mode = #tpu.pipeline_mode<synchronous>, transform_indices = @transform_5, window_bounds = array<i64: 16, 72>}, {pipeline_mode = #tpu.pipeline_mode<synchronous>, transform_indices = @transform_6, window_bounds = array<i64: 16, 1>}, {pipeline_mode = #tpu.pipeline_mode<synchronous>, transform_indices = @transform_7, window_bounds = array<i64: 8, 128>}, {pipeline_mode = #tpu.pipeline_mode<synchronous>, transform_indices = @transform_8, window_bounds = array<i64: 64, 16>}, {transform_indices = @transform_9, window_bounds = array<i64: 16, 32>}]} {
    %c0 = arith.constant 0 : index
    %c0_0 = arith.constant 0 : index
    %0 = vector.load %arg1[%c0, %c0_0] : memref<8x512xf32, #tpu.memory_space<vmem>>, vector<8x512xf32>
    %cst = arith.constant 0.000000e+00 : f32
    %1 = vector.broadcast %cst : f32 to vector<8x17xf32>
    %2 = vector.extract_strided_slice %0 {offsets = [0, 0], sizes = [8, 495], strides = [1, 1]} : vector<8x512xf32> to vector<8x495xf32>
    %3 = tpu.concatenate %1, %2 in 1 : vector<8x17xf32>, vector<8x495xf32> -> vector<8x512xf32>
    %c0_1 = arith.constant 0 : index
    %c0_2 = arith.constant 0 : index
    %4 = vector.load %arg4[%c0_1, %c0_2] : memref<8x512xf32, #tpu.memory_space<vmem>>, vector<1x512xf32>
    %5 = vector.broadcast %4 : vector<1x512xf32> to vector<8x512xf32>
    %6 = arith.mulf %3, %5 : vector<8x512xf32>
    %cst_3 = arith.constant 0.000000e+00 : f32
    %7 = vector.broadcast %cst_3 : f32 to vector<8x16xf32>
    %8 = vector.extract_strided_slice %0 {offsets = [0, 0], sizes = [8, 496], strides = [1, 1]} : vector<8x512xf32> to vector<8x496xf32>
    %9 = tpu.concatenate %7, %8 in 1 : vector<8x16xf32>, vector<8x496xf32> -> vector<8x512xf32>
    %c1 = arith.constant 1 : index
    %c0_4 = arith.constant 0 : index
    %10 = vector.load %arg4[%c1, %c0_4] : memref<8x512xf32, #tpu.memory_space<vmem>>, vector<1x512xf32>
    %11 = vector.broadcast %10 : vector<1x512xf32> to vector<8x512xf32>
    %12 = arith.mulf %9, %11 : vector<8x512xf32>
    %cst_5 = arith.constant 0.000000e+00 : f32
    %13 = vector.broadcast %cst_5 : f32 to vector<8x15xf32>
    %14 = vector.extract_strided_slice %0 {offsets = [0, 0], sizes = [8, 497], strides = [1, 1]} : vector<8x512xf32> to vector<8x497xf32>
    %15 = tpu.concatenate %13, %14 in 1 : vector<8x15xf32>, vector<8x497xf32> -> vector<8x512xf32>
    %c2 = arith.constant 2 : index
    %c0_6 = arith.constant 0 : index
    %16 = vector.load %arg4[%c2, %c0_6] : memref<8x512xf32, #tpu.memory_space<vmem>>, vector<1x512xf32>
    %17 = vector.broadcast %16 : vector<1x512xf32> to vector<8x512xf32>
    %18 = arith.mulf %15, %17 : vector<8x512xf32>
    %cst_7 = arith.constant 0.000000e+00 : f32
    %19 = vector.broadcast %cst_7 : f32 to vector<8x1xf32>
    %20 = vector.extract_strided_slice %0 {offsets = [0, 0], sizes = [8, 511], strides = [1, 1]} : vector<8x512xf32> to vector<8x511xf32>
    %21 = tpu.concatenate %19, %20 in 1 : vector<8x1xf32>, vector<8x511xf32> -> vector<8x512xf32>
    %c3 = arith.constant 3 : index
    %c0_8 = arith.constant 0 : index
    %22 = vector.load %arg4[%c3, %c0_8] : memref<8x512xf32, #tpu.memory_space<vmem>>, vector<1x512xf32>
    %23 = vector.broadcast %22 : vector<1x512xf32> to vector<8x512xf32>
    %24 = arith.mulf %21, %23 : vector<8x512xf32>
    %25 = vector.extract_strided_slice %0 {offsets = [0, 1], sizes = [8, 511], strides = [1, 1]} : vector<8x512xf32> to vector<8x511xf32>
    %cst_9 = arith.constant 0.000000e+00 : f32
    %26 = vector.broadcast %cst_9 : f32 to vector<8x1xf32>
    %27 = tpu.concatenate %25, %26 in 1 : vector<8x511xf32>, vector<8x1xf32> -> vector<8x512xf32>
    %c4 = arith.constant 4 : index
    %c0_10 = arith.constant 0 : index
    %28 = vector.load %arg4[%c4, %c0_10] : memref<8x512xf32, #tpu.memory_space<vmem>>, vector<1x512xf32>
    %29 = vector.broadcast %28 : vector<1x512xf32> to vector<8x512xf32>
    %30 = arith.mulf %27, %29 : vector<8x512xf32>
    %31 = vector.extract_strided_slice %0 {offsets = [0, 15], sizes = [8, 497], strides = [1, 1]} : vector<8x512xf32> to vector<8x497xf32>
    %cst_11 = arith.constant 0.000000e+00 : f32
    %32 = vector.broadcast %cst_11 : f32 to vector<8x15xf32>
    %33 = tpu.concatenate %31, %32 in 1 : vector<8x497xf32>, vector<8x15xf32> -> vector<8x512xf32>
    %c5 = arith.constant 5 : index
    %c0_12 = arith.constant 0 : index
    %34 = vector.load %arg4[%c5, %c0_12] : memref<8x512xf32, #tpu.memory_space<vmem>>, vector<1x512xf32>
    %35 = vector.broadcast %34 : vector<1x512xf32> to vector<8x512xf32>
    %36 = arith.mulf %33, %35 : vector<8x512xf32>
    %37 = vector.extract_strided_slice %0 {offsets = [0, 16], sizes = [8, 496], strides = [1, 1]} : vector<8x512xf32> to vector<8x496xf32>
    %cst_13 = arith.constant 0.000000e+00 : f32
    %38 = vector.broadcast %cst_13 : f32 to vector<8x16xf32>
    %39 = tpu.concatenate %37, %38 in 1 : vector<8x496xf32>, vector<8x16xf32> -> vector<8x512xf32>
    %c6 = arith.constant 6 : index
    %c0_14 = arith.constant 0 : index
    %40 = vector.load %arg4[%c6, %c0_14] : memref<8x512xf32, #tpu.memory_space<vmem>>, vector<1x512xf32>
    %41 = vector.broadcast %40 : vector<1x512xf32> to vector<8x512xf32>
    %42 = arith.mulf %39, %41 : vector<8x512xf32>
    %43 = vector.extract_strided_slice %0 {offsets = [0, 17], sizes = [8, 495], strides = [1, 1]} : vector<8x512xf32> to vector<8x495xf32>
    %cst_15 = arith.constant 0.000000e+00 : f32
    %44 = vector.broadcast %cst_15 : f32 to vector<8x17xf32>
    %45 = tpu.concatenate %43, %44 in 1 : vector<8x495xf32>, vector<8x17xf32> -> vector<8x512xf32>
    %c7 = arith.constant 7 : index
    %c0_16 = arith.constant 0 : index
    %46 = vector.load %arg4[%c7, %c0_16] : memref<8x512xf32, #tpu.memory_space<vmem>>, vector<1x512xf32>
    %47 = vector.broadcast %46 : vector<1x512xf32> to vector<8x512xf32>
    %48 = arith.mulf %45, %47 : vector<8x512xf32>
    %49 = tpu.concatenate %6, %12, %18, %24, %0, %30, %36, %42, %48 in 0 : vector<8x512xf32>, vector<8x512xf32>, vector<8x512xf32>, vector<8x512xf32>, vector<8x512xf32>, vector<8x512xf32>, vector<8x512xf32>, vector<8x512xf32>, vector<8x512xf32> -> vector<72x512xf32>
    %c0_17 = arith.constant 0 : index
    %c0_18 = arith.constant 0 : index
    %50 = vector.load %arg2[%c0_17, %c0_18] : memref<8x72xf32, #tpu.memory_space<vmem>>, vector<8x72xf32>
    %cst_19 = arith.constant dense<0.000000e+00> : vector<8x512xf32>
    %51 = tpu.matmul %50, %49, %cst_19 {dimension_numbers = #tpu.dot_dimension_numbers<[1], [0], [0], [1], [0, 0, 1, 1], [], []>} : vector<8x72xf32>, vector<72x512xf32>, vector<8x512xf32> -> vector<8x512xf32>
    %c0_20 = arith.constant 0 : index
    %c0_21 = arith.constant 0 : index
    %52 = vector.load %arg3[%c0_20, %c0_21] : memref<8x1xf32, #tpu.memory_space<vmem>>, vector<8x1xf32>
    %53 = vector.broadcast %52 : vector<8x1xf32> to vector<8x512xf32>
    %54 = arith.addf %51, %53 : vector<8x512xf32>
    %cst_22 = arith.constant 0.000000e+00 : f32
    %55 = vector.broadcast %cst_22 : f32 to vector<8x512xf32>
    %56 = arith.maximumf %54, %55 : vector<8x512xf32>
    %57 = vector.extract_strided_slice %56 {offsets = [0, 1], sizes = [8, 511], strides = [1, 1]} : vector<8x512xf32> to vector<8x511xf32>
    %cst_23 = arith.constant 0.000000e+00 : f32
    %58 = vector.broadcast %cst_23 : f32 to vector<8x1xf32>
    %59 = tpu.concatenate %57, %58 in 1 : vector<8x511xf32>, vector<8x1xf32> -> vector<8x512xf32>
    %60 = arith.maximumf %56, %59 : vector<8x512xf32>
    %61 = vector.extract_strided_slice %60 {offsets = [0, 16], sizes = [8, 496], strides = [1, 1]} : vector<8x512xf32> to vector<8x496xf32>
    %cst_24 = arith.constant 0.000000e+00 : f32
    %62 = vector.broadcast %cst_24 : f32 to vector<8x16xf32>
    %63 = tpu.concatenate %61, %62 in 1 : vector<8x496xf32>, vector<8x16xf32> -> vector<8x512xf32>
    %64 = arith.maximumf %60, %63 : vector<8x512xf32>
    %65 = vector.extract_strided_slice %64 {offsets = [0, 0], sizes = [8, 256], strides = [1, 1]} : vector<8x512xf32> to vector<8x256xf32>
    %c0_25 = arith.constant 0 : index
    %c0_26 = arith.constant 0 : index
    %66 = vector.load %arg5[%c0_25, %c0_26] : memref<256x64xf32, #tpu.memory_space<vmem>>, vector<256x64xf32>
    %cst_27 = arith.constant dense<0.000000e+00> : vector<8x64xf32>
    %67 = tpu.matmul %65, %66, %cst_27 {dimension_numbers = #tpu.dot_dimension_numbers<[1], [0], [0], [1], [0, 0, 1, 1], [], []>} : vector<8x256xf32>, vector<256x64xf32>, vector<8x64xf32> -> vector<8x64xf32>
    %68 = vector.extract_strided_slice %64 {offsets = [0, 256], sizes = [8, 256], strides = [1, 1]} : vector<8x512xf32> to vector<8x256xf32>
    %c0_28 = arith.constant 0 : index
    %c0_29 = arith.constant 0 : index
    %69 = vector.load %arg5[%c0_28, %c0_29] : memref<256x64xf32, #tpu.memory_space<vmem>>, vector<256x64xf32>
    %cst_30 = arith.constant dense<0.000000e+00> : vector<8x64xf32>
    %70 = tpu.matmul %68, %69, %cst_30 {dimension_numbers = #tpu.dot_dimension_numbers<[1], [0], [0], [1], [0, 0, 1, 1], [], []>} : vector<8x256xf32>, vector<256x64xf32>, vector<8x64xf32> -> vector<8x64xf32>
    %71 = tpu.concatenate %67, %70 in 1 : vector<8x64xf32>, vector<8x64xf32> -> vector<8x128xf32>
    %cst_31 = arith.constant 0.000000e+00 : f32
    %72 = vector.broadcast %cst_31 : f32 to vector<8x9xf32>
    %73 = vector.extract_strided_slice %71 {offsets = [0, 0], sizes = [8, 119], strides = [1, 1]} : vector<8x128xf32> to vector<8x119xf32>
    %74 = tpu.concatenate %72, %73 in 1 : vector<8x9xf32>, vector<8x119xf32> -> vector<8x128xf32>
    %c0_32 = arith.constant 0 : index
    %c0_33 = arith.constant 0 : index
    %75 = vector.load %arg8[%c0_32, %c0_33] : memref<8x128xf32, #tpu.memory_space<vmem>>, vector<1x128xf32>
    %76 = vector.broadcast %75 : vector<1x128xf32> to vector<8x128xf32>
    %77 = arith.mulf %74, %76 : vector<8x128xf32>
    %cst_34 = arith.constant 0.000000e+00 : f32
    %78 = vector.broadcast %cst_34 : f32 to vector<8x8xf32>
    %79 = vector.extract_strided_slice %71 {offsets = [0, 0], sizes = [8, 120], strides = [1, 1]} : vector<8x128xf32> to vector<8x120xf32>
    %80 = tpu.concatenate %78, %79 in 1 : vector<8x8xf32>, vector<8x120xf32> -> vector<8x128xf32>
    %c1_35 = arith.constant 1 : index
    %c0_36 = arith.constant 0 : index
    %81 = vector.load %arg8[%c1_35, %c0_36] : memref<8x128xf32, #tpu.memory_space<vmem>>, vector<1x128xf32>
    %82 = vector.broadcast %81 : vector<1x128xf32> to vector<8x128xf32>
    %83 = arith.mulf %80, %82 : vector<8x128xf32>
    %cst_37 = arith.constant 0.000000e+00 : f32
    %84 = vector.broadcast %cst_37 : f32 to vector<8x7xf32>
    %85 = vector.extract_strided_slice %71 {offsets = [0, 0], sizes = [8, 121], strides = [1, 1]} : vector<8x128xf32> to vector<8x121xf32>
    %86 = tpu.concatenate %84, %85 in 1 : vector<8x7xf32>, vector<8x121xf32> -> vector<8x128xf32>
    %c2_38 = arith.constant 2 : index
    %c0_39 = arith.constant 0 : index
    %87 = vector.load %arg8[%c2_38, %c0_39] : memref<8x128xf32, #tpu.memory_space<vmem>>, vector<1x128xf32>
    %88 = vector.broadcast %87 : vector<1x128xf32> to vector<8x128xf32>
    %89 = arith.mulf %86, %88 : vector<8x128xf32>
    %cst_40 = arith.constant 0.000000e+00 : f32
    %90 = vector.broadcast %cst_40 : f32 to vector<8x1xf32>
    %91 = vector.extract_strided_slice %71 {offsets = [0, 0], sizes = [8, 127], strides = [1, 1]} : vector<8x128xf32> to vector<8x127xf32>
    %92 = tpu.concatenate %90, %91 in 1 : vector<8x1xf32>, vector<8x127xf32> -> vector<8x128xf32>
    %c3_41 = arith.constant 3 : index
    %c0_42 = arith.constant 0 : index
    %93 = vector.load %arg8[%c3_41, %c0_42] : memref<8x128xf32, #tpu.memory_space<vmem>>, vector<1x128xf32>
    %94 = vector.broadcast %93 : vector<1x128xf32> to vector<8x128xf32>
    %95 = arith.mulf %92, %94 : vector<8x128xf32>
    %96 = vector.extract_strided_slice %71 {offsets = [0, 1], sizes = [8, 127], strides = [1, 1]} : vector<8x128xf32> to vector<8x127xf32>
    %cst_43 = arith.constant 0.000000e+00 : f32
    %97 = vector.broadcast %cst_43 : f32 to vector<8x1xf32>
    %98 = tpu.concatenate %96, %97 in 1 : vector<8x127xf32>, vector<8x1xf32> -> vector<8x128xf32>
    %c4_44 = arith.constant 4 : index
    %c0_45 = arith.constant 0 : index
    %99 = vector.load %arg8[%c4_44, %c0_45] : memref<8x128xf32, #tpu.memory_space<vmem>>, vector<1x128xf32>
    %100 = vector.broadcast %99 : vector<1x128xf32> to vector<8x128xf32>
    %101 = arith.mulf %98, %100 : vector<8x128xf32>
    %102 = vector.extract_strided_slice %71 {offsets = [0, 7], sizes = [8, 121], strides = [1, 1]} : vector<8x128xf32> to vector<8x121xf32>
    %cst_46 = arith.constant 0.000000e+00 : f32
    %103 = vector.broadcast %cst_46 : f32 to vector<8x7xf32>
    %104 = tpu.concatenate %102, %103 in 1 : vector<8x121xf32>, vector<8x7xf32> -> vector<8x128xf32>
    %c5_47 = arith.constant 5 : index
    %c0_48 = arith.constant 0 : index
    %105 = vector.load %arg8[%c5_47, %c0_48] : memref<8x128xf32, #tpu.memory_space<vmem>>, vector<1x128xf32>
    %106 = vector.broadcast %105 : vector<1x128xf32> to vector<8x128xf32>
    %107 = arith.mulf %104, %106 : vector<8x128xf32>
    %108 = vector.extract_strided_slice %71 {offsets = [0, 8], sizes = [8, 120], strides = [1, 1]} : vector<8x128xf32> to vector<8x120xf32>
    %cst_49 = arith.constant 0.000000e+00 : f32
    %109 = vector.broadcast %cst_49 : f32 to vector<8x8xf32>
    %110 = tpu.concatenate %108, %109 in 1 : vector<8x120xf32>, vector<8x8xf32> -> vector<8x128xf32>
    %c6_50 = arith.constant 6 : index
    %c0_51 = arith.constant 0 : index
    %111 = vector.load %arg8[%c6_50, %c0_51] : memref<8x128xf32, #tpu.memory_space<vmem>>, vector<1x128xf32>
    %112 = vector.broadcast %111 : vector<1x128xf32> to vector<8x128xf32>
    %113 = arith.mulf %110, %112 : vector<8x128xf32>
    %114 = vector.extract_strided_slice %71 {offsets = [0, 9], sizes = [8, 119], strides = [1, 1]} : vector<8x128xf32> to vector<8x119xf32>
    %cst_52 = arith.constant 0.000000e+00 : f32
    %115 = vector.broadcast %cst_52 : f32 to vector<8x9xf32>
    %116 = tpu.concatenate %114, %115 in 1 : vector<8x119xf32>, vector<8x9xf32> -> vector<8x128xf32>
    %c7_53 = arith.constant 7 : index
    %c0_54 = arith.constant 0 : index
    %117 = vector.load %arg8[%c7_53, %c0_54] : memref<8x128xf32, #tpu.memory_space<vmem>>, vector<1x128xf32>
    %118 = vector.broadcast %117 : vector<1x128xf32> to vector<8x128xf32>
    %119 = arith.mulf %116, %118 : vector<8x128xf32>
    %120 = tpu.concatenate %77, %83, %89, %95, %71, %101, %107, %113, %119 in 0 : vector<8x128xf32>, vector<8x128xf32>, vector<8x128xf32>, vector<8x128xf32>, vector<8x128xf32>, vector<8x128xf32>, vector<8x128xf32>, vector<8x128xf32>, vector<8x128xf32> -> vector<72x128xf32>
    %c0_55 = arith.constant 0 : index
    %c0_56 = arith.constant 0 : index
    %121 = vector.load %arg6[%c0_55, %c0_56] : memref<16x72xf32, #tpu.memory_space<vmem>>, vector<16x72xf32>
    %cst_57 = arith.constant dense<0.000000e+00> : vector<16x128xf32>
    %122 = tpu.matmul %121, %120, %cst_57 {dimension_numbers = #tpu.dot_dimension_numbers<[1], [0], [0], [1], [0, 0, 1, 1], [], []>} : vector<16x72xf32>, vector<72x128xf32>, vector<16x128xf32> -> vector<16x128xf32>
    %c0_58 = arith.constant 0 : index
    %c0_59 = arith.constant 0 : index
    %123 = vector.load %arg7[%c0_58, %c0_59] : memref<16x1xf32, #tpu.memory_space<vmem>>, vector<16x1xf32>
    %124 = vector.broadcast %123 : vector<16x1xf32> to vector<16x128xf32>
    %125 = arith.addf %122, %124 : vector<16x128xf32>
    %cst_60 = arith.constant 0.000000e+00 : f32
    %126 = vector.broadcast %cst_60 : f32 to vector<16x128xf32>
    %127 = arith.maximumf %125, %126 : vector<16x128xf32>
    %128 = vector.extract_strided_slice %127 {offsets = [0, 1], sizes = [16, 127], strides = [1, 1]} : vector<16x128xf32> to vector<16x127xf32>
    %cst_61 = arith.constant 0.000000e+00 : f32
    %129 = vector.broadcast %cst_61 : f32 to vector<16x1xf32>
    %130 = tpu.concatenate %128, %129 in 1 : vector<16x127xf32>, vector<16x1xf32> -> vector<16x128xf32>
    %131 = arith.maximumf %127, %130 : vector<16x128xf32>
    %132 = vector.extract_strided_slice %131 {offsets = [0, 8], sizes = [16, 120], strides = [1, 1]} : vector<16x128xf32> to vector<16x120xf32>
    %cst_62 = arith.constant 0.000000e+00 : f32
    %133 = vector.broadcast %cst_62 : f32 to vector<16x8xf32>
    %134 = tpu.concatenate %132, %133 in 1 : vector<16x120xf32>, vector<16x8xf32> -> vector<16x128xf32>
    %135 = arith.maximumf %131, %134 : vector<16x128xf32>
    %136 = vector.extract_strided_slice %135 {offsets = [0, 0], sizes = [16, 64], strides = [1, 1]} : vector<16x128xf32> to vector<16x64xf32>
    %c0_63 = arith.constant 0 : index
    %c0_64 = arith.constant 0 : index
    %137 = vector.load %arg9[%c0_63, %c0_64] : memref<64x16xf32, #tpu.memory_space<vmem>>, vector<64x16xf32>
    %cst_65 = arith.constant dense<0.000000e+00> : vector<16x16xf32>
    %138 = tpu.matmul %136, %137, %cst_65 {dimension_numbers = #tpu.dot_dimension_numbers<[1], [0], [0], [1], [0, 0, 1, 1], [], []>} : vector<16x64xf32>, vector<64x16xf32>, vector<16x16xf32> -> vector<16x16xf32>
    %139 = vector.extract_strided_slice %135 {offsets = [0, 64], sizes = [16, 64], strides = [1, 1]} : vector<16x128xf32> to vector<16x64xf32>
    %c0_66 = arith.constant 0 : index
    %c0_67 = arith.constant 0 : index
    %140 = vector.load %arg9[%c0_66, %c0_67] : memref<64x16xf32, #tpu.memory_space<vmem>>, vector<64x16xf32>
    %cst_68 = arith.constant dense<0.000000e+00> : vector<16x16xf32>
    %141 = tpu.matmul %139, %140, %cst_68 {dimension_numbers = #tpu.dot_dimension_numbers<[1], [0], [0], [1], [0, 0, 1, 1], [], []>} : vector<16x64xf32>, vector<64x16xf32>, vector<16x16xf32> -> vector<16x16xf32>
    %142 = tpu.concatenate %138, %141 in 1 : vector<16x16xf32>, vector<16x16xf32> -> vector<16x32xf32>
    %c0_69 = arith.constant 0 : index
    %c0_70 = arith.constant 0 : index
    %143 = vector.load %arg10[%c0_69, %c0_70] : memref<16x32xf32, #tpu.memory_space<vmem>>, vector<16x32xf32>
    tpu.vector_store %arg10[%c0_69, %c0_70], %142 {strides = array<i32>} : memref<16x32xf32, #tpu.memory_space<vmem>>, vector<16x32xf32>,
    return
  }
  func.func @transform_0(%arg0: i32) -> (i32, i32) {
    %c0_i32 = arith.constant 0 : i32
    %c0_i32_0 = arith.constant 0 : i32
    return %c0_i32, %arg0 : i32, i32
  }
  func.func @transform_1(%arg0: i32) -> (i32, i32) {
    %c0_i32 = arith.constant 0 : i32
    %c0_i32_0 = arith.constant 0 : i32
    %c0_i32_1 = arith.constant 0 : i32
    return %c0_i32, %c0_i32_0 : i32, i32
  }
  func.func @transform_2(%arg0: i32) -> (i32, i32) {
    %c0_i32 = arith.constant 0 : i32
    %c0_i32_0 = arith.constant 0 : i32
    %c0_i32_1 = arith.constant 0 : i32
    return %c0_i32, %c0_i32_0 : i32, i32
  }
  func.func @transform_3(%arg0: i32) -> (i32, i32) {
    %c0_i32 = arith.constant 0 : i32
    %c0_i32_0 = arith.constant 0 : i32
    %c0_i32_1 = arith.constant 0 : i32
    return %c0_i32, %c0_i32_0 : i32, i32
  }
  func.func @transform_4(%arg0: i32) -> (i32, i32) {
    %c0_i32 = arith.constant 0 : i32
    %c0_i32_0 = arith.constant 0 : i32
    %c0_i32_1 = arith.constant 0 : i32
    return %c0_i32, %c0_i32_0 : i32, i32
  }
  func.func @transform_5(%arg0: i32) -> (i32, i32) {
    %c0_i32 = arith.constant 0 : i32
    %c0_i32_0 = arith.constant 0 : i32
    %c0_i32_1 = arith.constant 0 : i32
    return %c0_i32, %c0_i32_0 : i32, i32
  }
  func.func @transform_6(%arg0: i32) -> (i32, i32) {
    %c0_i32 = arith.constant 0 : i32
    %c0_i32_0 = arith.constant 0 : i32
    %c0_i32_1 = arith.constant 0 : i32
    return %c0_i32, %c0_i32_0 : i32, i32
  }
  func.func @transform_7(%arg0: i32) -> (i32, i32) {
    %c0_i32 = arith.constant 0 : i32
    %c0_i32_0 = arith.constant 0 : i32
    %c0_i32_1 = arith.constant 0 : i32
    return %c0_i32, %c0_i32_0 : i32, i32
  }
  func.func @transform_8(%arg0: i32) -> (i32, i32) {
    %c0_i32 = arith.constant 0 : i32
    %c0_i32_0 = arith.constant 0 : i32
    %c0_i32_1 = arith.constant 0 : i32
    return %c0_i32, %c0_i32_0 : i32, i32
  }
  func.func @transform_9(%arg0: i32) -> (i32, i32) {
    %c0_i32 = arith.constant 0 : i32
    %c0_i32_0 = arith.constant 0 : i32
    return %c0_i32, %arg0 : i32, i32
  }
}

</mosaic_0001>

<llo_original>
// kernel: vgg_conv_blocks_forward.1
$region0: #{vgg_conv_blocks_forward.1}
  #allocation0 [shape = 'u32[]', space=smem, size = 0x4, offset = 0x4, fixed_abs, tag = 'smem constant byte address 0x4 - core index']
  #allocation1 [shape = 'u32[144,128]{1,0:T(1,128)}', space=vmem, size = 0x12000, scoped, tag = 'internal scratch']
  %s0 = inlined_call_operand.vmem [shape: f32[8,512], index: 0, kind: input, shape index: {}]
  %s1 = inlined_call_operand.vmem [shape: f32[8,72], index: 1, kind: input, shape index: {}]
  %s2 = inlined_call_operand.vmem [shape: f32[8,1], index: 2, kind: input, shape index: {}]
  %s3 = inlined_call_operand.vmem [shape: f32[8,512], index: 3, kind: input, shape index: {}]
  %s4 = inlined_call_operand.vmem [shape: f32[256,64], index: 4, kind: input, shape index: {}]
  %s5 = inlined_call_operand.vmem [shape: f32[16,72], index: 5, kind: input, shape index: {}]
  %s6 = inlined_call_operand.vmem [shape: f32[16,1], index: 6, kind: input, shape index: {}]
  %s7 = inlined_call_operand.vmem [shape: f32[8,128], index: 7, kind: input, shape index: {}]
  %s8 = inlined_call_operand.vmem [shape: f32[64,16], index: 8, kind: input, shape index: {}]
  %s9 = inlined_call_operand.vmem [shape: f32[16,32], index: 9, kind: output, shape index: {}]
  %s10 = sld [smem:[#allocation0]]
  $region46: #{vgg_conv_blocks_forward.1} parent=0
    _
  %s12 = ssub.s32 1, %s10
  %s13 = scalar_select 0, %s12, %s10
  // Predicated region
  $region2: #{vgg_conv_blocks_forward.1} parent=0 // pred_check
    _
  $region3: #{vgg_conv_blocks_forward.1} parent=0 // pred_check_branch
    %15 = sbr.rel (0) target = $region5
  $region4: #{vgg_conv_blocks_forward.1} parent=0 // pred_region
    _
  $region5: #{vgg_conv_blocks_forward.1} parent=0 // pred_fallthru
    _
  // Predicated region
  $region6: #{vgg_conv_blocks_forward.1} parent=0 // pred_check
    _
  $region7: #{vgg_conv_blocks_forward.1} parent=0 // pred_check_branch
    %17 = sbr.rel (0) target = $region9
  $region8: #{vgg_conv_blocks_forward.1} parent=0 // pred_region
    _
  $region9: #{vgg_conv_blocks_forward.1} parent=0 // pred_fallthru
    _
  // Predicated region
  $region10: #{vgg_conv_blocks_forward.1} parent=0 // pred_check
    _
  $region11: #{vgg_conv_blocks_forward.1} parent=0 // pred_check_branch
    %19 = sbr.rel (0) target = $region13
  $region12: #{vgg_conv_blocks_forward.1} parent=0 // pred_region
    _
  $region13: #{vgg_conv_blocks_forward.1} parent=0 // pred_fallthru
    _
  // Predicated region
  $region14: #{vgg_conv_blocks_forward.1} parent=0 // pred_check
    _
  $region15: #{vgg_conv_blocks_forward.1} parent=0 // pred_check_branch
    %21 = sbr.rel (0) target = $region17
  $region16: #{vgg_conv_blocks_forward.1} parent=0 // pred_region
    _
  $region17: #{vgg_conv_blocks_forward.1} parent=0 // pred_fallthru
    _
  // Predicated region
  $region18: #{vgg_conv_blocks_forward.1} parent=0 // pred_check
    _
  $region19: #{vgg_conv_blocks_forward.1} parent=0 // pred_check_branch
    %23 = sbr.rel (0) target = $region21
  $region20: #{vgg_conv_blocks_forward.1} parent=0 // pred_region
    _
  $region21: #{vgg_conv_blocks_forward.1} parent=0 // pred_fallthru
    _
  // Predicated region
  $region22: #{vgg_conv_blocks_forward.1} parent=0 // pred_check
    _
  $region23: #{vgg_conv_blocks_forward.1} parent=0 // pred_check_branch
    %25 = sbr.rel (0) target = $region25
  $region24: #{vgg_conv_blocks_forward.1} parent=0 // pred_region
    _
  $region25: #{vgg_conv_blocks_forward.1} parent=0 // pred_fallthru
    _
  // Predicated region
  $region26: #{vgg_conv_blocks_forward.1} parent=0 // pred_check
    _
  $region27: #{vgg_conv_blocks_forward.1} parent=0 // pred_check_branch
    %27 = sbr.rel (0) target = $region29
  $region28: #{vgg_conv_blocks_forward.1} parent=0 // pred_region
    _
  $region29: #{vgg_conv_blocks_forward.1} parent=0 // pred_fallthru
    _
  // Predicated region
  $region30: #{vgg_conv_blocks_forward.1} parent=0 // pred_check
    _
  $region31: #{vgg_conv_blocks_forward.1} parent=0 // pred_check_branch
    %29 = sbr.rel (0) target = $region33
  $region32: #{vgg_conv_blocks_forward.1} parent=0 // pred_region
    _
  $region33: #{vgg_conv_blocks_forward.1} parent=0 // pred_fallthru
    _
  // Predicated region
  $region34: #{vgg_conv_blocks_forward.1} parent=0 // pred_check
    _
  $region35: #{vgg_conv_blocks_forward.1} parent=0 // pred_check_branch
    %31 = sbr.rel (0) target = $region37
  $region36: #{vgg_conv_blocks_forward.1} parent=0 // pred_region
    _
  $region37: #{vgg_conv_blocks_forward.1} parent=0 // pred_fallthru
    _
  %v32 = vld [vmem:[%s0] sm:$0xff]
  %v33 = vld [vmem:[%s0 + $0x8] sm:$0xff]
  %v34 = vld [vmem:[%s0 + $0x10] sm:$0xff]
  %v35 = vld [vmem:[%s0 + $0x18] sm:$0xff]
  %40 = vrot.lane.b32.xlu0 %v32, 17
  %v41 = vpop.permute.xlu0 %40
  %42 = vrot.lane.b32.xlu0 %v33, 17
  %v43 = vpop.permute.xlu0 %42
  %44 = vrot.lane.b32.xlu0 %v34, 17
  %v45 = vpop.permute.xlu0 %44
  %46 = vrot.lane.b32.xlu0 %v35, 17
  %v47 = vpop.permute.xlu0 %46
  %vm48 = vcmask 138240
  %v49 = vsel %vm48, %v41, %v43
  %v50 = vsel %vm48, %v43, %v45
  %v51 = vsel %vm48, %v45, %v47
  %v56 = vsel %vm48, 0.0, %v41
  %v57 = vld [vmem:[%s3] ss:$8 sm:$0xf]
  %v59 = vlaneseq
  %v60 = vshrl.u32 %v59, 7
  %v61 = vsub.s32 0, %v60
  %v62 = vrot.slane %v57, %v61
  %v63 = vlaneseq
  %v64 = vshrl.u32 %v63, 7
  %v65 = vsub.s32 1, %v64
  %v66 = vrot.slane %v57, %v65
  %v67 = vlaneseq
  %v68 = vshrl.u32 %v67, 7
  %v69 = vsub.s32 2, %v68
  %v70 = vrot.slane %v57, %v69
  %v71 = vlaneseq
  %v72 = vshrl.u32 %v71, 7
  %v73 = vsub.s32 3, %v72
  %v74 = vrot.slane %v57, %v73
  %v79 = vmul.f32 %v56, %v62
  %v80 = vmul.f32 %v49, %v66
  %v81 = vmul.f32 %v50, %v70
  %v82 = vmul.f32 %v51, %v74
  %83 = vrot.lane.b32.xlu0 %v32, 16
  %v84 = vpop.permute.xlu0 %83
  %85 = vrot.lane.b32.xlu0 %v33, 16
  %v86 = vpop.permute.xlu0 %85
  %87 = vrot.lane.b32.xlu0 %v34, 16
  %v88 = vpop.permute.xlu0 %87
  %89 = vrot.lane.b32.xlu0 %v35, 16
  %v90 = vpop.permute.xlu0 %89
  %vm91 = vcmask 130048
  %v92 = vsel %vm91, %v84, %v86
  %v93 = vsel %vm91, %v86, %v88
  %v94 = vsel %vm91, %v88, %v90
  %v99 = vsel %vm91, 0.0, %v84
  %s100 = scalar_lea.vmem %s3, 1
  %v101 = vld [vmem:[%s100] ss:$8 sm:$0xf]
  %v103 = vlaneseq
  %v104 = vshrl.u32 %v103, 7
  %v105 = vsub.s32 0, %v104
  %v106 = vrot.slane %v101, %v105
  %v107 = vlaneseq
  %v108 = vshrl.u32 %v107, 7
  %v109 = vsub.s32 1, %v108
  %v110 = vrot.slane %v101, %v109
  %v111 = vlaneseq
  %v112 = vshrl.u32 %v111, 7
  %v113 = vsub.s32 2, %v112
  %v114 = vrot.slane %v101, %v113
  %v115 = vlaneseq
  %v116 = vshrl.u32 %v115, 7
  %v117 = vsub.s32 3, %v116
  %v118 = vrot.slane %v101, %v117
  %v123 = vmul.f32 %v99, %v106
  %v124 = vmul.f32 %v92, %v110
  %v125 = vmul.f32 %v93, %v114
  %v126 = vmul.f32 %v94, %v118
  %127 = vrot.lane.b32.xlu0 %v32, 15
  %v128 = vpop.permute.xlu0 %127
  %129 = vrot.lane.b32.xlu0 %v33, 15
  %v130 = vpop.permute.xlu0 %129
  %131 = vrot.lane.b32.xlu0 %v34, 15
  %v132 = vpop.permute.xlu0 %131
  %133 = vrot.lane.b32.xlu0 %v35, 15
  %v134 = vpop.permute.xlu0 %133
  %vm135 = vcmask 121856
  %v136 = vsel %vm135, %v128, %v130
  %v137 = vsel %vm135, %v130, %v132
  %v138 = vsel %vm135, %v132, %v134
  %v143 = vsel %vm135, 0.0, %v128
  %s144 = scalar_lea.vmem %s3, 2
  %v145 = vld [vmem:[%s144] ss:$8 sm:$0xf]
  %v147 = vlaneseq
  %v148 = vshrl.u32 %v147, 7
  %v149 = vsub.s32 0, %v148
  %v150 = vrot.slane %v145, %v149
  %v151 = vlaneseq
  %v152 = vshrl.u32 %v151, 7
  %v153 = vsub.s32 1, %v152
  %v154 = vrot.slane %v145, %v153
  %v155 = vlaneseq
  %v156 = vshrl.u32 %v155, 7
  %v157 = vsub.s32 2, %v156
  %v158 = vrot.slane %v145, %v157
  %v159 = vlaneseq
  %v160 = vshrl.u32 %v159, 7
  %v161 = vsub.s32 3, %v160
  %v162 = vrot.slane %v145, %v161
  %v167 = vmul.f32 %v143, %v150
  %v168 = vmul.f32 %v136, %v154
  %v169 = vmul.f32 %v137, %v158
  %v170 = vmul.f32 %v138, %v162
  %171 = vrot.lane.b32.xlu0 %v32, 1
  %v172 = vpop.permute.xlu0 %171
  %173 = vrot.lane.b32.xlu0 %v33, 1
  %v174 = vpop.permute.xlu0 %173
  %175 = vrot.lane.b32.xlu0 %v34, 1
  %v176 = vpop.permute.xlu0 %175
  %177 = vrot.lane.b32.xlu0 %v35, 1
  %v178 = vpop.permute.xlu0 %177
  %vm179 = vcmask 7168
  %v180 = vsel %vm179, %v172, %v174
  %v181 = vsel %vm179, %v174, %v176
  %v182 = vsel %vm179, %v176, %v178
  %v187 = vsel %vm179, 0.0, %v172
  %s188 = scalar_lea.vmem %s3, 3
  %v189 = vld [vmem:[%s188] ss:$8 sm:$0xf]
  %v191 = vlaneseq
  %v192 = vshrl.u32 %v191, 7
  %v193 = vsub.s32 0, %v192
  %v194 = vrot.slane %v189, %v193
  %v195 = vlaneseq
  %v196 = vshrl.u32 %v195, 7
  %v197 = vsub.s32 1, %v196
  %v198 = vrot.slane %v189, %v197
  %v199 = vlaneseq
  %v200 = vshrl.u32 %v199, 7
  %v201 = vsub.s32 2, %v200
  %v202 = vrot.slane %v189, %v201
  %v203 = vlaneseq
  %v204 = vshrl.u32 %v203, 7
  %v205 = vsub.s32 3, %v204
  %v206 = vrot.slane %v189, %v205
  %v211 = vmul.f32 %v187, %v194
  %v212 = vmul.f32 %v180, %v198
  %v213 = vmul.f32 %v181, %v202
  %v214 = vmul.f32 %v182, %v206
  %215 = vrot.lane.b32.xlu0 %v32, 127
  %v216 = vpop.permute.xlu0 %215
  %217 = vrot.lane.b32.xlu0 %v33, 127
  %v218 = vpop.permute.xlu0 %217
  %219 = vrot.lane.b32.xlu0 %v34, 127
  %v220 = vpop.permute.xlu0 %219
  %221 = vrot.lane.b32.xlu0 %v35, 127
  %v222 = vpop.permute.xlu0 %221
  %vm223 = vcmask 1039360
  %v224 = vsel %vm223, %v216, %v218
  %v225 = vsel %vm223, %v218, %v220
  %v226 = vsel %vm223, %v220, %v222
  %v231 = vsel %vm223, %v222, 0.0
  %s232 = scalar_lea.vmem %s3, 4
  %v233 = vld [vmem:[%s232] ss:$8 sm:$0xf]
  %v235 = vlaneseq
  %v236 = vshrl.u32 %v235, 7
  %v237 = vsub.s32 0, %v236
  %v238 = vrot.slane %v233, %v237
  %v239 = vlaneseq
  %v240 = vshrl.u32 %v239, 7
  %v241 = vsub.s32 1, %v240
  %v242 = vrot.slane %v233, %v241
  %v243 = vlaneseq
  %v244 = vshrl.u32 %v243, 7
  %v245 = vsub.s32 2, %v244
  %v246 = vrot.slane %v233, %v245
  %v247 = vlaneseq
  %v248 = vshrl.u32 %v247, 7
  %v249 = vsub.s32 3, %v248
  %v250 = vrot.slane %v233, %v249
  %v255 = vmul.f32 %v224, %v238
  %v256 = vmul.f32 %v225, %v242
  %v257 = vmul.f32 %v226, %v246
  %v258 = vmul.f32 %v231, %v250
  %259 = vrot.lane.b32.xlu0 %v32, 113
  %v260 = vpop.permute.xlu0 %259
  %261 = vrot.lane.b32.xlu0 %v33, 113
  %v262 = vpop.permute.xlu0 %261
  %263 = vrot.lane.b32.xlu0 %v34, 113
  %v264 = vpop.permute.xlu0 %263
  %265 = vrot.lane.b32.xlu0 %v35, 113
  %v266 = vpop.permute.xlu0 %265
  %vm267 = vcmask 924672
  %v268 = vsel %vm267, %v260, %v262
  %v269 = vsel %vm267, %v262, %v264
  %v270 = vsel %vm267, %v264, %v266
  %v275 = vsel %vm267, %v266, 0.0
  %s276 = scalar_lea.vmem %s3, 5
  %v277 = vld [vmem:[%s276] ss:$8 sm:$0xf]
  %v279 = vlaneseq
  %v280 = vshrl.u32 %v279, 7
  %v281 = vsub.s32 0, %v280
  %v282 = vrot.slane %v277, %v281
  %v283 = vlaneseq
  %v284 = vshrl.u32 %v283, 7
  %v285 = vsub.s32 1, %v284
  %v286 = vrot.slane %v277, %v285
  %v287 = vlaneseq
  %v288 = vshrl.u32 %v287, 7
  %v289 = vsub.s32 2, %v288
  %v290 = vrot.slane %v277, %v289
  %v291 = vlaneseq
  %v292 = vshrl.u32 %v291, 7
  %v293 = vsub.s32 3, %v292
  %v294 = vrot.slane %v277, %v293
  %v299 = vmul.f32 %v268, %v282
  %v300 = vmul.f32 %v269, %v286
  %v301 = vmul.f32 %v270, %v290
  %v302 = vmul.f32 %v275, %v294
  %303 = vrot.lane.b32.xlu0 %v32, 112
  %v304 = vpop.permute.xlu0 %303
  %305 = vrot.lane.b32.xlu0 %v33, 112
  %v306 = vpop.permute.xlu0 %305
  %307 = vrot.lane.b32.xlu0 %v34, 112
  %v308 = vpop.permute.xlu0 %307
  %309 = vrot.lane.b32.xlu0 %v35, 112
  %v310 = vpop.permute.xlu0 %309
  %vm311 = vcmask 916480
  %v312 = vsel %vm311, %v304, %v306
  %v313 = vsel %vm311, %v306, %v308
  %v314 = vsel %vm311, %v308, %v310
  %v319 = vsel %vm311, %v310, 0.0
  %s320 = scalar_lea.vmem %s3, 6
  %v321 = vld [vmem:[%s320] ss:$8 sm:$0xf]
  %v323 = vlaneseq
  %v324 = vshrl.u32 %v323, 7
  %v325 = vsub.s32 0, %v324
  %v326 = vrot.slane %v321, %v325
  %v327 = vlaneseq
  %v328 = vshrl.u32 %v327, 7
  %v329 = vsub.s32 1, %v328
  %v330 = vrot.slane %v321, %v329
  %v331 = vlaneseq
  %v332 = vshrl.u32 %v331, 7
  %v333 = vsub.s32 2, %v332
  %v334 = vrot.slane %v321, %v333
  %v335 = vlaneseq
  %v336 = vshrl.u32 %v335, 7
  %v337 = vsub.s32 3, %v336
  %v338 = vrot.slane %v321, %v337
  %v343 = vmul.f32 %v312, %v326
  %v344 = vmul.f32 %v313, %v330
  %v345 = vmul.f32 %v314, %v334
  %v346 = vmul.f32 %v319, %v338
  %347 = vrot.lane.b32.xlu0 %v32, 111
  %v348 = vpop.permute.xlu0 %347
  %349 = vrot.lane.b32.xlu0 %v33, 111
  %v350 = vpop.permute.xlu0 %349
  %351 = vrot.lane.b32.xlu0 %v34, 111
  %v352 = vpop.permute.xlu0 %351
  %353 = vrot.lane.b32.xlu0 %v35, 111
  %v354 = vpop.permute.xlu0 %353
  %vm355 = vcmask 908288
  %v356 = vsel %vm355, %v348, %v350
  %v357 = vsel %vm355, %v350, %v352
  %v358 = vsel %vm355, %v352, %v354
  %v363 = vsel %vm355, %v354, 0.0
  %s364 = scalar_lea.vmem %s3, 7
  %v365 = vld [vmem:[%s364] ss:$8 sm:$0xf]
  %v367 = vlaneseq
  %v368 = vshrl.u32 %v367, 7
  %v369 = vsub.s32 0, %v368
  %v370 = vrot.slane %v365, %v369
  %v371 = vlaneseq
  %v372 = vshrl.u32 %v371, 7
  %v373 = vsub.s32 1, %v372
  %v374 = vrot.slane %v365, %v373
  %v375 = vlaneseq
  %v376 = vshrl.u32 %v375, 7
  %v377 = vsub.s32 2, %v376
  %v378 = vrot.slane %v365, %v377
  %v379 = vlaneseq
  %v380 = vshrl.u32 %v379, 7
  %v381 = vsub.s32 3, %v380
  %v382 = vrot.slane %v365, %v381
  %v387 = vmul.f32 %v356, %v370
  %v388 = vmul.f32 %v357, %v374
  %v389 = vmul.f32 %v358, %v378
  %v390 = vmul.f32 %v363, %v382
  %v391 = vld [vmem:[%s1] sm:$0xff]
  %v392 = vld [vmem:[%s2] sm:$0xff]
  %394 = vset.pattern.permute.xlu0 0
  %395 = vperm.xlu0 %394, %v392
  %v396 = vpop.permute.xlu0 %395
  %vm398 = vcmask 588800
  %v400 = vsel %vm398, %v391, 0
  %402 = vmatprep.subr.mxu0 0.0
  %403 = vmatpush1.msra.mxu0 0.0
  %404 = vmatprep.subr.mxu0 0.0
  %405 = vmatpush1.msra.mxu0 0.0
  %406 = vmatprep.subr.mxu0 0.0
  %407 = vmatpush1.msra.mxu0 0.0
  %408 = vmatprep.subr.mxu0 0.0
  %409 = vmatpush1.msra.mxu0 0.0
  %410 = vmatprep.subr.mxu0 0.0
  %411 = vmatpush1.msra.mxu0 0.0
  %412 = vmatprep.subr.mxu0 0.0
  %413 = vmatpush1.msra.mxu0 0.0
  %414 = vmatprep.subr.mxu0 0.0
  %415 = vmatpush1.msra.mxu0 0.0
  %416 = vmatprep.subr.mxu0 %v388
  %417 = vmatpush1.msra.mxu0 %v387
  %418 = vmatprep.subr.mxu0 %v344
  %419 = vmatpush1.msra.mxu0 %v343
  %420 = vmatprep.subr.mxu0 %v300
  %421 = vmatpush1.msra.mxu0 %v299
  %422 = vmatprep.subr.mxu0 %v256
  %423 = vmatpush1.msra.mxu0 %v255
  %424 = vmatprep.subr.mxu0 %v33
  %425 = vmatpush1.msra.mxu0 %v32
  %426 = vmatprep.subr.mxu0 %v212
  %427 = vmatpush1.msra.mxu0 %v211
  %428 = vmatprep.subr.mxu0 %v168
  %429 = vmatpush1.msra.mxu0 %v167
  %430 = vmatprep.subr.mxu0 %v124
  %431 = vmatpush1.msra.mxu0 %v123
  %432 = vmatprep.subr.mxu0 %v80
  %433 = vmatpush1.msra.mxu0 %v79
  %434 = vmatprep.subr.mxu0 0.0
  %435 = vmatpush2.msra.mxu0 0.0
  %436 = vmatprep.subr.mxu0 0.0
  %437 = vmatpush2.msra.mxu0 0.0
  %438 = vmatprep.subr.mxu0 0.0
  %439 = vmatpush2.msra.mxu0 0.0
  %440 = vmatprep.subr.mxu0 0.0
  %441 = vmatpush2.msra.mxu0 0.0
  %442 = vmatprep.subr.mxu0 0.0
  %443 = vmatpush2.msra.mxu0 0.0
  %444 = vmatprep.subr.mxu0 0.0
  %445 = vmatpush2.msra.mxu0 0.0
  %446 = vmatprep.subr.mxu0 0.0
  %447 = vmatpush2.msra.mxu0 0.0
  %448 = vmatprep.subr.mxu0 0.0
  %449 = vmatpush2.msra.mxu0 0.0
  %450 = vmatprep.subr.mxu0 0.0
  %451 = vmatpush2.msra.mxu0 0.0
  %452 = vmatprep.subr.mxu0 0.0
  %453 = vmatpush2.msra.mxu0 0.0
  %454 = vmatprep.subr.mxu0 0.0
  %455 = vmatpush2.msra.mxu0 0.0
  %456 = vmatprep.subr.mxu0 0.0
  %457 = vmatpush2.msra.mxu0 0.0
  %458 = vmatprep.subr.mxu0 0.0
  %459 = vmatpush2.msra.mxu0 0.0
  %460 = vmatprep.subr.mxu0 0.0
  %461 = vmatpush2.msra.mxu0 0.0
  %462 = vmatprep.subr.mxu0 0.0
  %463 = vmatpush2.msra.mxu0 0.0
  %464 = vmatprep.subr.mxu0 0.0
  %465 = vmatpush2.msra.mxu0 0.0
  %466 = vmatprep.mubr.f32.mxu0 0.0
  %467 = vmatmul.mubr.f32.gmra.mxu0 %v400
  %v468 = vpop.f32.mrf.mxu0
  %v469 = vadd.f32 %v396, %v468
  %v470 = vpop.f32.mrf.mxu0
  %v471 = vadd.f32 %v396, %v470
  %472 = vdwg.mxu0
  %473 = vmatprep.subr.mxu0 0.0
  %474 = vmatpush1.msra.mxu0 0.0
  %475 = vmatprep.subr.mxu0 0.0
  %476 = vmatpush1.msra.mxu0 0.0
  %477 = vmatprep.subr.mxu0 0.0
  %478 = vmatpush1.msra.mxu0 0.0
  %479 = vmatprep.subr.mxu0 0.0
  %480 = vmatpush1.msra.mxu0 0.0
  %481 = vmatprep.subr.mxu0 0.0
  %482 = vmatpush1.msra.mxu0 0.0
  %483 = vmatprep.subr.mxu0 0.0
  %484 = vmatpush1.msra.mxu0 0.0
  %485 = vmatprep.subr.mxu0 0.0
  %486 = vmatpush1.msra.mxu0 0.0
  %487 = vmatprep.subr.mxu0 %v390
  %488 = vmatpush1.msra.mxu0 %v389
  %489 = vmatprep.subr.mxu0 %v346
  %490 = vmatpush1.msra.mxu0 %v345
  %491 = vmatprep.subr.mxu0 %v302
  %492 = vmatpush1.msra.mxu0 %v301
  %493 = vmatprep.subr.mxu0 %v258
  %494 = vmatpush1.msra.mxu0 %v257
  %495 = vmatprep.subr.mxu0 %v35
  %496 = vmatpush1.msra.mxu0 %v34
  %497 = vmatprep.subr.mxu0 %v214
  %498 = vmatpush1.msra.mxu0 %v213
  %499 = vmatprep.subr.mxu0 %v170
  %500 = vmatpush1.msra.mxu0 %v169
  %501 = vmatprep.subr.mxu0 %v126
  %502 = vmatpush1.msra.mxu0 %v125
  %503 = vmatprep.subr.mxu0 %v82
  %504 = vmatpush1.msra.mxu0 %v81
  %505 = vmatprep.subr.mxu0 0.0
  %506 = vmatpush2.msra.mxu0 0.0
  %507 = vmatprep.subr.mxu0 0.0
  %508 = vmatpush2.msra.mxu0 0.0
  %509 = vmatprep.subr.mxu0 0.0
  %510 = vmatpush2.msra.mxu0 0.0
  %511 = vmatprep.subr.mxu0 0.0
  %512 = vmatpush2.msra.mxu0 0.0
  %513 = vmatprep.subr.mxu0 0.0
  %514 = vmatpush2.msra.mxu0 0.0
  %515 = vmatprep.subr.mxu0 0.0
  %516 = vmatpush2.msra.mxu0 0.0
  %517 = vmatprep.subr.mxu0 0.0
  %518 = vmatpush2.msra.mxu0 0.0
  %519 = vmatprep.subr.mxu0 0.0
  %520 = vmatpush2.msra.mxu0 0.0
  %521 = vmatprep.subr.mxu0 0.0
  %522 = vmatpush2.msra.mxu0 0.0
  %523 = vmatprep.subr.mxu0 0.0
  %524 = vmatpush2.msra.mxu0 0.0
  %525 = vmatprep.subr.mxu0 0.0
  %526 = vmatpush2.msra.mxu0 0.0
  %527 = vmatprep.subr.mxu0 0.0
  %528 = vmatpush2.msra.mxu0 0.0
  %529 = vmatprep.subr.mxu0 0.0
  %530 = vmatpush2.msra.mxu0 0.0
  %531 = vmatprep.subr.mxu0 0.0
  %532 = vmatpush2.msra.mxu0 0.0
  %533 = vmatprep.subr.mxu0 0.0
  %534 = vmatpush2.msra.mxu0 0.0
  %535 = vmatprep.subr.mxu0 0.0
  %536 = vmatpush2.msra.mxu0 0.0
  %537 = vmatprep.mubr.f32.mxu0 0.0
  %538 = vmatmul.mubr.f32.gmra.mxu0 %v400
  %v539 = vpop.f32.mrf.mxu0
  %v540 = vadd.f32 %v396, %v539
  %v541 = vpop.f32.mrf.mxu0
  %v542 = vadd.f32 %v396, %v541
  %543 = vdwg.mxu0
  %v544 = vmax.f32 %v469, 0.0
  %v545 = vmax.f32 %v471, 0.0
  %v546 = vmax.f32 %v540, 0.0
  %v547 = vmax.f32 %v542, 0.0
  %552 = vrot.lane.b32.xlu0 %v544, 127
  %v553 = vpop.permute.xlu0 %552
  %554 = vrot.lane.b32.xlu0 %v545, 127
  %v555 = vpop.permute.xlu0 %554
  %556 = vrot.lane.b32.xlu0 %v546, 127
  %v557 = vpop.permute.xlu0 %556
  %558 = vrot.lane.b32.xlu0 %v547, 127
  %v559 = vpop.permute.xlu0 %558
  %v560 = vsel %vm223, %v553, %v555
  %v561 = vsel %vm223, %v555, %v557
  %v562 = vsel %vm223, %v557, %v559
  %v567 = vsel %vm223, %v559, 0.0
  %v568 = vmax.f32 %v544, %v560
  %v569 = vmax.f32 %v545, %v561
  %v570 = vmax.f32 %v546, %v562
  %v571 = vmax.f32 %v547, %v567
  %576 = vrot.lane.b32.xlu0 %v568, 112
  %v577 = vpop.permute.xlu0 %576
  %578 = vrot.lane.b32.xlu0 %v569, 112
  %v579 = vpop.permute.xlu0 %578
  %580 = vrot.lane.b32.xlu0 %v570, 112
  %v581 = vpop.permute.xlu0 %580
  %582 = vrot.lane.b32.xlu0 %v571, 112
  %v583 = vpop.permute.xlu0 %582
  %v584 = vsel %vm311, %v577, %v579
  %v585 = vsel %vm311, %v579, %v581
  %v586 = vsel %vm311, %v581, %v583
  %v591 = vsel %vm311, %v583, 0.0
  %v592 = vmax.f32 %v568, %v584
  %v593 = vmax.f32 %v569, %v585
  %v594 = vmax.f32 %v570, %v586
  %v595 = vmax.f32 %v571, %v591
  %v596 = vld [vmem:[%s4] sm:$0xff]
  %v597 = vld [vmem:[%s4 + $0x8] sm:$0xff]
  %v598 = vld [vmem:[%s4 + $0x10] sm:$0xff]
  %v599 = vld [vmem:[%s4 + $0x18] sm:$0xff]
  %v600 = vld [vmem:[%s4 + $0x20] sm:$0xff]
  %v601 = vld [vmem:[%s4 + $0x28] sm:$0xff]
  %v602 = vld [vmem:[%s4 + $0x30] sm:$0xff]
  %v603 = vld [vmem:[%s4 + $0x38] sm:$0xff]
  %v604 = vld [vmem:[%s4 + $0x40] sm:$0xff]
  %v605 = vld [vmem:[%s4 + $0x48] sm:$0xff]
  %v606 = vld [vmem:[%s4 + $0x50] sm:$0xff]
  %v607 = vld [vmem:[%s4 + $0x58] sm:$0xff]
  %v608 = vld [vmem:[%s4 + $0x60] sm:$0xff]
  %v609 = vld [vmem:[%s4 + $0x68] sm:$0xff]
  %v610 = vld [vmem:[%s4 + $0x70] sm:$0xff]
  %v611 = vld [vmem:[%s4 + $0x78] sm:$0xff]
  %v612 = vld [vmem:[%s4 + $0x80] sm:$0xff]
  %v613 = vld [vmem:[%s4 + $0x88] sm:$0xff]
  %v614 = vld [vmem:[%s4 + $0x90] sm:$0xff]
  %v615 = vld [vmem:[%s4 + $0x98] sm:$0xff]
  %v616 = vld [vmem:[%s4 + $0xa0] sm:$0xff]
  %v617 = vld [vmem:[%s4 + $0xa8] sm:$0xff]
  %v618 = vld [vmem:[%s4 + $0xb0] sm:$0xff]
  %v619 = vld [vmem:[%s4 + $0xb8] sm:$0xff]
  %v620 = vld [vmem:[%s4 + $0xc0] sm:$0xff]
  %v621 = vld [vmem:[%s4 + $0xc8] sm:$0xff]
  %v622 = vld [vmem:[%s4 + $0xd0] sm:$0xff]
  %v623 = vld [vmem:[%s4 + $0xd8] sm:$0xff]
  %v624 = vld [vmem:[%s4 + $0xe0] sm:$0xff]
  %v625 = vld [vmem:[%s4 + $0xe8] sm:$0xff]
  %v626 = vld [vmem:[%s4 + $0xf0] sm:$0xff]
  %v627 = vld [vmem:[%s4 + $0xf8] sm:$0xff]
  %628 = vmatprep.subr.mxu0 0.0
  %629 = vmatpush1.msra.mxu0 %v611
  %630 = vmatprep.subr.mxu0 0.0
  %631 = vmatpush1.msra.mxu0 %v610
  %632 = vmatprep.subr.mxu0 0.0
  %633 = vmatpush1.msra.mxu0 %v609
  %634 = vmatprep.subr.mxu0 0.0
  %635 = vmatpush1.msra.mxu0 %v608
  %636 = vmatprep.subr.mxu0 0.0
  %637 = vmatpush1.msra.mxu0 %v607
  %638 = vmatprep.subr.mxu0 0.0
  %639 = vmatpush1.msra.mxu0 %v606
  %640 = vmatprep.subr.mxu0 0.0
  %641 = vmatpush1.msra.mxu0 %v605
  %642 = vmatprep.subr.mxu0 0.0
  %643 = vmatpush1.msra.mxu0 %v604
  %644 = vmatprep.subr.mxu0 0.0
  %645 = vmatpush1.msra.mxu0 %v603
  %646 = vmatprep.subr.mxu0 0.0
  %647 = vmatpush1.msra.mxu0 %v602
  %648 = vmatprep.subr.mxu0 0.0
  %649 = vmatpush1.msra.mxu0 %v601
  %650 = vmatprep.subr.mxu0 0.0
  %651 = vmatpush1.msra.mxu0 %v600
  %652 = vmatprep.subr.mxu0 0.0
  %653 = vmatpush1.msra.mxu0 %v599
  %654 = vmatprep.subr.mxu0 0.0
  %655 = vmatpush1.msra.mxu0 %v598
  %656 = vmatprep.subr.mxu0 0.0
  %657 = vmatpush1.msra.mxu0 %v597
  %658 = vmatprep.subr.mxu0 0.0
  %659 = vmatpush1.msra.mxu0 %v596
  %660 = vmatprep.subr.mxu0 0.0
  %661 = vmatpush2.msra.mxu0 %v627
  %662 = vmatprep.subr.mxu0 0.0
  %663 = vmatpush2.msra.mxu0 %v626
  %664 = vmatprep.subr.mxu0 0.0
  %665 = vmatpush2.msra.mxu0 %v625
  %666 = vmatprep.subr.mxu0 0.0
  %667 = vmatpush2.msra.mxu0 %v624
  %668 = vmatprep.subr.mxu0 0.0
  %669 = vmatpush2.msra.mxu0 %v623
  %670 = vmatprep.subr.mxu0 0.0
  %671 = vmatpush2.msra.mxu0 %v622
  %672 = vmatprep.subr.mxu0 0.0
  %673 = vmatpush2.msra.mxu0 %v621
  %674 = vmatprep.subr.mxu0 0.0
  %675 = vmatpush2.msra.mxu0 %v620
  %676 = vmatprep.subr.mxu0 0.0
  %677 = vmatpush2.msra.mxu0 %v619
  %678 = vmatprep.subr.mxu0 0.0
  %679 = vmatpush2.msra.mxu0 %v618
  %680 = vmatprep.subr.mxu0 0.0
  %681 = vmatpush2.msra.mxu0 %v617
  %682 = vmatprep.subr.mxu0 0.0
  %683 = vmatpush2.msra.mxu0 %v616
  %684 = vmatprep.subr.mxu0 0.0
  %685 = vmatpush2.msra.mxu0 %v615
  %686 = vmatprep.subr.mxu0 0.0
  %687 = vmatpush2.msra.mxu0 %v614
  %688 = vmatprep.subr.mxu0 0.0
  %689 = vmatpush2.msra.mxu0 %v613
  %690 = vmatprep.subr.mxu0 0.0
  %691 = vmatpush2.msra.mxu0 %v612
  %692 = vmatprep.mubr.f32.mxu0 %v593
  %693 = vmatmul.mubr.f32.gmra.mxu0 %v592
  %v694 = vpop.f32.mrf.mxu0
  %v695 = vadd.f32 0.0, %v694
  %v696 = vpop.f32.mrf.mxu0
  %697 = vdwg.mxu0
  %698 = vmatprep.subr.mxu0 0.0
  %699 = vmatpush1.msra.mxu0 %v611
  %700 = vmatprep.subr.mxu0 0.0
  %701 = vmatpush1.msra.mxu0 %v610
  %702 = vmatprep.subr.mxu0 0.0
  %703 = vmatpush1.msra.mxu0 %v609
  %704 = vmatprep.subr.mxu0 0.0
  %705 = vmatpush1.msra.mxu0 %v608
  %706 = vmatprep.subr.mxu0 0.0
  %707 = vmatpush1.msra.mxu0 %v607
  %708 = vmatprep.subr.mxu0 0.0
  %709 = vmatpush1.msra.mxu0 %v606
  %710 = vmatprep.subr.mxu0 0.0
  %711 = vmatpush1.msra.mxu0 %v605
  %712 = vmatprep.subr.mxu0 0.0
  %713 = vmatpush1.msra.mxu0 %v604
  %714 = vmatprep.subr.mxu0 0.0
  %715 = vmatpush1.msra.mxu0 %v603
  %716 = vmatprep.subr.mxu0 0.0
  %717 = vmatpush1.msra.mxu0 %v602
  %718 = vmatprep.subr.mxu0 0.0
  %719 = vmatpush1.msra.mxu0 %v601
  %720 = vmatprep.subr.mxu0 0.0
  %721 = vmatpush1.msra.mxu0 %v600
  %722 = vmatprep.subr.mxu0 0.0
  %723 = vmatpush1.msra.mxu0 %v599
  %724 = vmatprep.subr.mxu0 0.0
  %725 = vmatpush1.msra.mxu0 %v598
  %726 = vmatprep.subr.mxu0 0.0
  %727 = vmatpush1.msra.mxu0 %v597
  %728 = vmatprep.subr.mxu0 0.0
  %729 = vmatpush1.msra.mxu0 %v596
  %730 = vmatprep.subr.mxu0 0.0
  %731 = vmatpush2.msra.mxu0 %v627
  %732 = vmatprep.subr.mxu0 0.0
  %733 = vmatpush2.msra.mxu0 %v626
  %734 = vmatprep.subr.mxu0 0.0
  %735 = vmatpush2.msra.mxu0 %v625
  %736 = vmatprep.subr.mxu0 0.0
  %737 = vmatpush2.msra.mxu0 %v624
  %738 = vmatprep.subr.mxu0 0.0
  %739 = vmatpush2.msra.mxu0 %v623
  %740 = vmatprep.subr.mxu0 0.0
  %741 = vmatpush2.msra.mxu0 %v622
  %742 = vmatprep.subr.mxu0 0.0
  %743 = vmatpush2.msra.mxu0 %v621
  %744 = vmatprep.subr.mxu0 0.0
  %745 = vmatpush2.msra.mxu0 %v620
  %746 = vmatprep.subr.mxu0 0.0
  %747 = vmatpush2.msra.mxu0 %v619
  %748 = vmatprep.subr.mxu0 0.0
  %749 = vmatpush2.msra.mxu0 %v618
  %750 = vmatprep.subr.mxu0 0.0
  %751 = vmatpush2.msra.mxu0 %v617
  %752 = vmatprep.subr.mxu0 0.0
  %753 = vmatpush2.msra.mxu0 %v616
  %754 = vmatprep.subr.mxu0 0.0
  %755 = vmatpush2.msra.mxu0 %v615
  %756 = vmatprep.subr.mxu0 0.0
  %757 = vmatpush2.msra.mxu0 %v614
  %758 = vmatprep.subr.mxu0 0.0
  %759 = vmatpush2.msra.mxu0 %v613
  %760 = vmatprep.subr.mxu0 0.0
  %761 = vmatpush2.msra.mxu0 %v612
  %762 = vmatprep.mubr.f32.mxu0 %v595
  %763 = vmatmul.mubr.f32.gmra.mxu0 %v594
  %v764 = vpop.f32.mrf.mxu0
  %v765 = vadd.f32 0.0, %v764
  %v766 = vpop.f32.mrf.mxu0
  %767 = vdwg.mxu0
  %769 = vrot.lane.b32.xlu0 %v765, 64
  %v770 = vpop.permute.xlu0 %769
  %vm772 = vcmask 523264
  %v773 = vsel %vm772, %v695, %v770
  %775 = vrot.lane.b32.xlu0 %v773, 9
  %v776 = vpop.permute.xlu0 %775
  %vm778 = vcmask 72704
  %v779 = vsel %vm778, 0.0, %v776
  %v780 = vld [vmem:[%s7] sm:$0x1]
  %v781 = vlaneseq
  %v782 = vshrl.u32 %v781, 7
  %v783 = vsub.s32 0, %v782
  %v784 = vrot.slane %v780, %v783
  %v785 = vmul.f32 %v779, %v784
  %786 = vrot.lane.b32.xlu0 %v773, 8
  %v787 = vpop.permute.xlu0 %786
  %vm789 = vcmask 64512
  %v790 = vsel %vm789, 0.0, %v787
  %v791 = vld [vmem:[%s7 + $0x1] sm:$0x1]
  %v792 = vlaneseq
  %v793 = vshrl.u32 %v792, 7
  %v794 = vsub.s32 0, %v793
  %v795 = vrot.slane %v791, %v794
  %v796 = vmul.f32 %v790, %v795
  %797 = vrot.lane.b32.xlu0 %v773, 7
  %v798 = vpop.permute.xlu0 %797
  %vm800 = vcmask 56320
  %v801 = vsel %vm800, 0.0, %v798
  %v802 = vld [vmem:[%s7 + $0x2] sm:$0x1]
  %v803 = vlaneseq
  %v804 = vshrl.u32 %v803, 7
  %v805 = vsub.s32 0, %v804
  %v806 = vrot.slane %v802, %v805
  %v807 = vmul.f32 %v801, %v806
  %808 = vrot.lane.b32.xlu0 %v773, 1
  %v809 = vpop.permute.xlu0 %808
  %v811 = vsel %vm179, 0.0, %v809
  %v812 = vld [vmem:[%s7 + $0x3] sm:$0x1]
  %v813 = vlaneseq
  %v814 = vshrl.u32 %v813, 7
  %v815 = vsub.s32 0, %v814
  %v816 = vrot.slane %v812, %v815
  %v817 = vmul.f32 %v811, %v816
  %818 = vrot.lane.b32.xlu0 %v773, 127
  %v819 = vpop.permute.xlu0 %818
  %v821 = vsel %vm223, %v819, 0.0
  %v822 = vld [vmem:[%s7 + $0x4] sm:$0x1]
  %v823 = vlaneseq
  %v824 = vshrl.u32 %v823, 7
  %v825 = vsub.s32 0, %v824
  %v826 = vrot.slane %v822, %v825
  %v827 = vmul.f32 %v821, %v826
  %828 = vrot.lane.b32.xlu0 %v773, 121
  %v829 = vpop.permute.xlu0 %828
  %vm831 = vcmask 990208
  %v832 = vsel %vm831, %v829, 0.0
  %v833 = vld [vmem:[%s7 + $0x5] sm:$0x1]
  %v834 = vlaneseq
  %v835 = vshrl.u32 %v834, 7
  %v836 = vsub.s32 0, %v835
  %v837 = vrot.slane %v833, %v836
  %v838 = vmul.f32 %v832, %v837
  %839 = vrot.lane.b32.xlu0 %v773, 120
  %v840 = vpop.permute.xlu0 %839
  %vm842 = vcmask 982016
  %v843 = vsel %vm842, %v840, 0.0
  %v844 = vld [vmem:[%s7 + $0x6] sm:$0x1]
  %v845 = vlaneseq
  %v846 = vshrl.u32 %v845, 7
  %v847 = vsub.s32 0, %v846
  %v848 = vrot.slane %v844, %v847
  %v849 = vmul.f32 %v843, %v848
  %850 = vrot.lane.b32.xlu0 %v773, 119
  %v851 = vpop.permute.xlu0 %850
  %vm853 = vcmask 973824
  %v854 = vsel %vm853, %v851, 0.0
  %v855 = vld [vmem:[%s7 + $0x7] sm:$0x1]
  %v856 = vlaneseq
  %v857 = vshrl.u32 %v856, 7
  %v858 = vsub.s32 0, %v857
  %v859 = vrot.slane %v855, %v858
  %v860 = vmul.f32 %v854, %v859
  %v861 = vld [vmem:[%s5] sm:$0xff]
  %v862 = vld [vmem:[%s5 + $0x8] sm:$0xff]
  %v863 = vld [vmem:[%s6] sm:$0xff]
  %v864 = vld [vmem:[%s6 + $0x8] sm:$0xff]
  %866 = vset.pattern.permute.xlu0 0
  %867 = vperm.xlu0 %866, %v863
  %v868 = vpop.permute.xlu0 %867
  %871 = vset.pattern.permute.xlu0 0
  %872 = vperm.xlu0 %871, %v864
  %v873 = vpop.permute.xlu0 %872
  %v876 = vsel %vm398, %v861, 0
  %v879 = vsel %vm398, %v862, 0
  %881 = vmatprep.subr.mxu0 0.0
  %882 = vmatpush1.msra.mxu0 0.0
  %883 = vmatprep.subr.mxu0 0.0
  %884 = vmatpush1.msra.mxu0 0.0
  %885 = vmatprep.subr.mxu0 0.0
  %886 = vmatpush1.msra.mxu0 0.0
  %887 = vmatprep.subr.mxu0 0.0
  %888 = vmatpush1.msra.mxu0 0.0
  %889 = vmatprep.subr.mxu0 0.0
  %890 = vmatpush1.msra.mxu0 0.0
  %891 = vmatprep.subr.mxu0 0.0
  %892 = vmatpush1.msra.mxu0 0.0
  %893 = vmatprep.subr.mxu0 0.0
  %894 = vmatpush1.msra.mxu0 0.0
  %895 = vmatprep.subr.mxu0 0.0
  %896 = vmatpush1.msra.mxu0 %v860
  %897 = vmatprep.subr.mxu0 0.0
  %898 = vmatpush1.msra.mxu0 %v849
  %899 = vmatprep.subr.mxu0 0.0
  %900 = vmatpush1.msra.mxu0 %v838
  %901 = vmatprep.subr.mxu0 0.0
  %902 = vmatpush1.msra.mxu0 %v827
  %903 = vmatprep.subr.mxu0 0.0
  %904 = vmatpush1.msra.mxu0 %v773
  %905 = vmatprep.subr.mxu0 0.0
  %906 = vmatpush1.msra.mxu0 %v817
  %907 = vmatprep.subr.mxu0 0.0
  %908 = vmatpush1.msra.mxu0 %v807
  %909 = vmatprep.subr.mxu0 0.0
  %910 = vmatpush1.msra.mxu0 %v796
  %911 = vmatprep.subr.mxu0 0.0
  %912 = vmatpush1.msra.mxu0 %v785
  %913 = vmatprep.subr.mxu0 0.0
  %914 = vmatpush2.msra.mxu0 0.0
  %915 = vmatprep.subr.mxu0 0.0
  %916 = vmatpush2.msra.mxu0 0.0
  %917 = vmatprep.subr.mxu0 0.0
  %918 = vmatpush2.msra.mxu0 0.0
  %919 = vmatprep.subr.mxu0 0.0
  %920 = vmatpush2.msra.mxu0 0.0
  %921 = vmatprep.subr.mxu0 0.0
  %922 = vmatpush2.msra.mxu0 0.0
  %923 = vmatprep.subr.mxu0 0.0
  %924 = vmatpush2.msra.mxu0 0.0
  %925 = vmatprep.subr.mxu0 0.0
  %926 = vmatpush2.msra.mxu0 0.0
  %927 = vmatprep.subr.mxu0 0.0
  %928 = vmatpush2.msra.mxu0 0.0
  %929 = vmatprep.subr.mxu0 0.0
  %930 = vmatpush2.msra.mxu0 0.0
  %931 = vmatprep.subr.mxu0 0.0
  %932 = vmatpush2.msra.mxu0 0.0
  %933 = vmatprep.subr.mxu0 0.0
  %934 = vmatpush2.msra.mxu0 0.0
  %935 = vmatprep.subr.mxu0 0.0
  %936 = vmatpush2.msra.mxu0 0.0
  %937 = vmatprep.subr.mxu0 0.0
  %938 = vmatpush2.msra.mxu0 0.0
  %939 = vmatprep.subr.mxu0 0.0
  %940 = vmatpush2.msra.mxu0 0.0
  %941 = vmatprep.subr.mxu0 0.0
  %942 = vmatpush2.msra.mxu0 0.0
  %943 = vmatprep.subr.mxu0 0.0
  %944 = vmatpush2.msra.mxu0 0.0
  %945 = vmatprep.mubr.f32.mxu0 0.0
  %946 = vmatmul.mubr.f32.gmra.mxu0 %v876
  %v947 = vpop.f32.mrf.mxu0
  %v948 = vadd.f32 %v868, %v947
  %v949 = vpop.f32.mrf.mxu0
  %950 = vmatprep.mubr.f32.mxu0 0.0
  %951 = vmatmul.mubr.f32.gmra.mxu0 %v879
  %v952 = vpop.f32.mrf.mxu0
  %v953 = vadd.f32 %v873, %v952
  %v954 = vpop.f32.mrf.mxu0
  %955 = vdwg.mxu0
  %v956 = vmax.f32 %v948, 0.0
  %v957 = vmax.f32 %v953, 0.0
  %960 = vrot.lane.b32.xlu0 %v956, 127
  %v961 = vpop.permute.xlu0 %960
  %962 = vrot.lane.b32.xlu0 %v957, 127
  %v963 = vpop.permute.xlu0 %962
  %v966 = vsel %vm223, %v961, 0.0
  %v967 = vsel %vm223, %v963, 0.0
  %v968 = vmax.f32 %v956, %v966
  %v969 = vmax.f32 %v957, %v967
  %972 = vrot.lane.b32.xlu0 %v968, 120
  %v973 = vpop.permute.xlu0 %972
  %974 = vrot.lane.b32.xlu0 %v969, 120
  %v975 = vpop.permute.xlu0 %974
  %v978 = vsel %vm842, %v973, 0.0
  %v979 = vsel %vm842, %v975, 0.0
  %v980 = vmax.f32 %v968, %v978
  %v981 = vmax.f32 %v969, %v979
  %v982 = vld [vmem:[%s8] sm:$0xff]
  %v983 = vld [vmem:[%s8 + $0x8] sm:$0xff]
  %v984 = vld [vmem:[%s8 + $0x10] sm:$0xff]
  %v985 = vld [vmem:[%s8 + $0x18] sm:$0xff]
  %v986 = vld [vmem:[%s8 + $0x20] sm:$0xff]
  %v987 = vld [vmem:[%s8 + $0x28] sm:$0xff]
  %v988 = vld [vmem:[%s8 + $0x30] sm:$0xff]
  %v989 = vld [vmem:[%s8 + $0x38] sm:$0xff]
  %v991 = vsel %vm772, %v980, 0
  %v994 = vsel %vm772, %v981, 0
  %996 = vmatprep.subr.mxu0 0.0
  %997 = vmatpush1.msra.mxu0 0.0
  %998 = vmatprep.subr.mxu0 0.0
  %999 = vmatpush1.msra.mxu0 0.0
  %1000 = vmatprep.subr.mxu0 0.0
  %1001 = vmatpush1.msra.mxu0 0.0
  %1002 = vmatprep.subr.mxu0 0.0
  %1003 = vmatpush1.msra.mxu0 0.0
  %1004 = vmatprep.subr.mxu0 0.0
  %1005 = vmatpush1.msra.mxu0 0.0
  %1006 = vmatprep.subr.mxu0 0.0
  %1007 = vmatpush1.msra.mxu0 0.0
  %1008 = vmatprep.subr.mxu0 0.0
  %1009 = vmatpush1.msra.mxu0 0.0
  %1010 = vmatprep.subr.mxu0 0.0
  %1011 = vmatpush1.msra.mxu0 0.0
  %1012 = vmatprep.subr.mxu0 0.0
  %1013 = vmatpush1.msra.mxu0 %v989
  %1014 = vmatprep.subr.mxu0 0.0
  %1015 = vmatpush1.msra.mxu0 %v988
  %1016 = vmatprep.subr.mxu0 0.0
  %1017 = vmatpush1.msra.mxu0 %v987
  %1018 = vmatprep.subr.mxu0 0.0
  %1019 = vmatpush1.msra.mxu0 %v986
  %1020 = vmatprep.subr.mxu0 0.0
  %1021 = vmatpush1.msra.mxu0 %v985
  %1022 = vmatprep.subr.mxu0 0.0
  %1023 = vmatpush1.msra.mxu0 %v984
  %1024 = vmatprep.subr.mxu0 0.0
  %1025 = vmatpush1.msra.mxu0 %v983
  %1026 = vmatprep.subr.mxu0 0.0
  %1027 = vmatpush1.msra.mxu0 %v982
  %1028 = vmatprep.subr.mxu0 0.0
  %1029 = vmatpush2.msra.mxu0 0.0
  %1030 = vmatprep.subr.mxu0 0.0
  %1031 = vmatpush2.msra.mxu0 0.0
  %1032 = vmatprep.subr.mxu0 0.0
  %1033 = vmatpush2.msra.mxu0 0.0
  %1034 = vmatprep.subr.mxu0 0.0
  %1035 = vmatpush2.msra.mxu0 0.0
  %1036 = vmatprep.subr.mxu0 0.0
  %1037 = vmatpush2.msra.mxu0 0.0
  %1038 = vmatprep.subr.mxu0 0.0
  %1039 = vmatpush2.msra.mxu0 0.0
  %1040 = vmatprep.subr.mxu0 0.0
  %1041 = vmatpush2.msra.mxu0 0.0
  %1042 = vmatprep.subr.mxu0 0.0
  %1043 = vmatpush2.msra.mxu0 0.0
  %1044 = vmatprep.subr.mxu0 0.0
  %1045 = vmatpush2.msra.mxu0 0.0
  %1046 = vmatprep.subr.mxu0 0.0
  %1047 = vmatpush2.msra.mxu0 0.0
  %1048 = vmatprep.subr.mxu0 0.0
  %1049 = vmatpush2.msra.mxu0 0.0
  %1050 = vmatprep.subr.mxu0 0.0
  %1051 = vmatpush2.msra.mxu0 0.0
  %1052 = vmatprep.subr.mxu0 0.0
  %1053 = vmatpush2.msra.mxu0 0.0
  %1054 = vmatprep.subr.mxu0 0.0
  %1055 = vmatpush2.msra.mxu0 0.0
  %1056 = vmatprep.subr.mxu0 0.0
  %1057 = vmatpush2.msra.mxu0 0.0
  %1058 = vmatprep.subr.mxu0 0.0
  %1059 = vmatpush2.msra.mxu0 0.0
  %1060 = vmatprep.mubr.f32.mxu0 0.0
  %1061 = vmatmul.mubr.f32.gmra.mxu0 %v991
  %v1062 = vpop.f32.mrf.mxu0
  %v1063 = vadd.f32 0.0, %v1062
  %v1064 = vpop.f32.mrf.mxu0
  %1065 = vmatprep.mubr.f32.mxu0 0.0
  %1066 = vmatmul.mubr.f32.gmra.mxu0 %v994
  %v1067 = vpop.f32.mrf.mxu0
  %v1068 = vadd.f32 0.0, %v1067
  %v1069 = vpop.f32.mrf.mxu0
  %1070 = vdwg.mxu0
  %1071 = vrot.lane.b32.xlu0 %v980, 64
  %v1072 = vpop.permute.xlu0 %1071
  %1073 = vrot.lane.b32.xlu0 %v981, 64
  %v1074 = vpop.permute.xlu0 %1073
  %v1075 = vsel %vm772, %v1072, 0
  %v1077 = vsel %vm772, %v1074, 0
  %1079 = vmatprep.subr.mxu0 0.0
  %1080 = vmatpush1.msra.mxu0 0.0
  %1081 = vmatprep.subr.mxu0 0.0
  %1082 = vmatpush1.msra.mxu0 0.0
  %1083 = vmatprep.subr.mxu0 0.0
  %1084 = vmatpush1.msra.mxu0 0.0
  %1085 = vmatprep.subr.mxu0 0.0
  %1086 = vmatpush1.msra.mxu0 0.0
  %1087 = vmatprep.subr.mxu0 0.0
  %1088 = vmatpush1.msra.mxu0 0.0
  %1089 = vmatprep.subr.mxu0 0.0
  %1090 = vmatpush1.msra.mxu0 0.0
  %1091 = vmatprep.subr.mxu0 0.0
  %1092 = vmatpush1.msra.mxu0 0.0
  %1093 = vmatprep.subr.mxu0 0.0
  %1094 = vmatpush1.msra.mxu0 0.0
  %1095 = vmatprep.subr.mxu0 0.0
  %1096 = vmatpush1.msra.mxu0 %v989
  %1097 = vmatprep.subr.mxu0 0.0
  %1098 = vmatpush1.msra.mxu0 %v988
  %1099 = vmatprep.subr.mxu0 0.0
  %1100 = vmatpush1.msra.mxu0 %v987
  %1101 = vmatprep.subr.mxu0 0.0
  %1102 = vmatpush1.msra.mxu0 %v986
  %1103 = vmatprep.subr.mxu0 0.0
  %1104 = vmatpush1.msra.mxu0 %v985
  %1105 = vmatprep.subr.mxu0 0.0
  %1106 = vmatpush1.msra.mxu0 %v984
  %1107 = vmatprep.subr.mxu0 0.0
  %1108 = vmatpush1.msra.mxu0 %v983
  %1109 = vmatprep.subr.mxu0 0.0
  %1110 = vmatpush1.msra.mxu0 %v982
  %1111 = vmatprep.subr.mxu0 0.0
  %1112 = vmatpush2.msra.mxu0 0.0
  %1113 = vmatprep.subr.mxu0 0.0
  %1114 = vmatpush2.msra.mxu0 0.0
  %1115 = vmatprep.subr.mxu0 0.0
  %1116 = vmatpush2.msra.mxu0 0.0
  %1117 = vmatprep.subr.mxu0 0.0
  %1118 = vmatpush2.msra.mxu0 0.0
  %1119 = vmatprep.subr.mxu0 0.0
  %1120 = vmatpush2.msra.mxu0 0.0
  %1121 = vmatprep.subr.mxu0 0.0
  %1122 = vmatpush2.msra.mxu0 0.0
  %1123 = vmatprep.subr.mxu0 0.0
  %1124 = vmatpush2.msra.mxu0 0.0
  %1125 = vmatprep.subr.mxu0 0.0
  %1126 = vmatpush2.msra.mxu0 0.0
  %1127 = vmatprep.subr.mxu0 0.0
  %1128 = vmatpush2.msra.mxu0 0.0
  %1129 = vmatprep.subr.mxu0 0.0
  %1130 = vmatpush2.msra.mxu0 0.0
  %1131 = vmatprep.subr.mxu0 0.0
  %1132 = vmatpush2.msra.mxu0 0.0
  %1133 = vmatprep.subr.mxu0 0.0
  %1134 = vmatpush2.msra.mxu0 0.0
  %1135 = vmatprep.subr.mxu0 0.0
  %1136 = vmatpush2.msra.mxu0 0.0
  %1137 = vmatprep.subr.mxu0 0.0
  %1138 = vmatpush2.msra.mxu0 0.0
  %1139 = vmatprep.subr.mxu0 0.0
  %1140 = vmatpush2.msra.mxu0 0.0
  %1141 = vmatprep.subr.mxu0 0.0
  %1142 = vmatpush2.msra.mxu0 0.0
  %1143 = vmatprep.mubr.f32.mxu0 0.0
  %1144 = vmatmul.mubr.f32.gmra.mxu0 %v1075
  %v1145 = vpop.f32.mrf.mxu0
  %v1146 = vadd.f32 0.0, %v1145
  %v1147 = vpop.f32.mrf.mxu0
  %1148 = vmatprep.mubr.f32.mxu0 0.0
  %1149 = vmatmul.mubr.f32.gmra.mxu0 %v1077
  %v1150 = vpop.f32.mrf.mxu0
  %v1151 = vadd.f32 0.0, %v1150
  %v1152 = vpop.f32.mrf.mxu0
  %1153 = vdwg.mxu0
  %1156 = vrot.lane.b32.xlu0 %v1146, 16
  %v1157 = vpop.permute.xlu0 %1156
  %1158 = vrot.lane.b32.xlu0 %v1151, 16
  %v1159 = vpop.permute.xlu0 %1158
  %v1162 = vsel %vm91, %v1063, %v1157
  %v1163 = vsel %vm91, %v1068, %v1159
  %vm1164 = vcmask 261120
  %1165 = vst.msk [vmem:[%s9] sm:$0xff] %vm1164, %v1162
  %1166 = vst.msk [vmem:[%s9 + $0x8] sm:$0xff] %vm1164, %v1163
  // Predicated region
  $region38: #{vgg_conv_blocks_forward.1} parent=0 // pred_check
    _
  $region39: #{vgg_conv_blocks_forward.1} parent=0 // pred_check_branch
    %1168 = sbr.rel (0) target = $region41
  $region40: #{vgg_conv_blocks_forward.1} parent=0 // pred_region
    _
  $region41: #{vgg_conv_blocks_forward.1} parent=0 // pred_fallthru
    _
  // Predicated region
  $region42: #{vgg_conv_blocks_forward.1} parent=0 // pred_check
    _
  $region43: #{vgg_conv_blocks_forward.1} parent=0 // pred_check_branch
    %1170 = sbr.rel (0) target = $region45
  $region44: #{vgg_conv_blocks_forward.1} parent=0 // pred_region
    _
  $region45: #{vgg_conv_blocks_forward.1} parent=0 // pred_fallthru
    _

</llo_original>
